<compile_context>
chip_gen: v6e
topology: v6e:2x2x1
jax: 0.10.0
libtpu: 0.0.40
codegen_flags: <defaults>
</compile_context>

<pallas_src>
import functools

import jax
import jax.numpy as jnp
from jax import lax
from jax.experimental import pallas as pl
from jax.experimental.pallas import tpu as pltpu


def _sdp_kernel(has_mask, *refs):
    if has_mask:
        q_ref, k_ref, v_ref, mask_ref, o_ref, m_sc, l_sc, acc_sc = refs
    else:
        q_ref, k_ref, v_ref, o_ref, m_sc, l_sc, acc_sc = refs
        mask_ref = None

    kv = pl.program_id(2)

    @pl.when(kv == 0)
    def _():
        m_sc[...] = jnp.full_like(m_sc, -jnp.inf)
        l_sc[...] = jnp.zeros_like(l_sc)
        acc_sc[...] = jnp.zeros_like(acc_sc)

    q = q_ref[0]          # (tq, D)
    k = k_ref[0]          # (tk, D)
    v = v_ref[0]          # (tk, Dv)

    # scores = q @ k.T : contract the feature dim directly (no in-kernel .T)
    s = lax.dot_general(q, k, (((1,), (1,)), ((), ())),
                        preferred_element_type=jnp.float32)       # (tq, tk)
    if has_mask:
        s = s + mask_ref[0].astype(jnp.float32)

    m_prev = m_sc[...]                                            # (tq, 1)
    m_new = jnp.maximum(m_prev, s.max(axis=-1, keepdims=True))
    alpha = jnp.exp(m_prev - m_new)
    p = jnp.exp(s - m_new)                                        # (tq, tk)

    l_sc[...] = alpha * l_sc[...] + p.sum(axis=-1, keepdims=True)
    acc_sc[...] = alpha * acc_sc[...] + jnp.dot(
        p.astype(v.dtype), v, preferred_element_type=jnp.float32)
    m_sc[...] = m_new

    @pl.when(kv == pl.num_programs(2) - 1)
    def _():
        o_ref[0] = (acc_sc[...] / l_sc[...]).astype(o_ref.dtype)


def scaled_dot_product(query, key, value, attn_mask=None,
                       dropout=0.0, training=False,
                       block_q=128, block_k=128):
    """Pallas implementation of ScaledDotProduct.forward.

    query: (B, Lq, D), key: (B, Lk, D), value: (B, Lk, Dv)
    attn_mask: None or broadcastable to (B, Lq, Lk), added to the scores.
    returns: (B, Lq, Dv)
    """
    B, Lq, D = query.shape
    Bk, Lk, Dk = key.shape
    Bv, Lv, Dv = value.shape
    assert B == Bk == Bv and D == Dk and Lk == Lv

    if dropout > 0.0 and training:
        # TODO(synk): training-mode attention dropout (needs in-kernel PRNG on
        # the un-normalized weights); only the eval / p=0.0 path is implemented.
        raise NotImplementedError("training-mode dropout not implemented")

    tq = min(block_q, Lq)
    tk = min(block_k, Lk)
    assert Lq % tq == 0 and Lk % tk == 0, "seq lengths must divide the tile sizes"

    grid = (B, Lq // tq, Lk // tk)

    in_specs = [
        pl.BlockSpec((1, tq, D), lambda b, qi, ki: (b, qi, 0)),
        pl.BlockSpec((1, tk, D), lambda b, qi, ki: (b, ki, 0)),
        pl.BlockSpec((1, tk, Dv), lambda b, qi, ki: (b, ki, 0)),
    ]
    args = [query, key, value]

    has_mask = attn_mask is not None
    if has_mask:
        attn_mask = jnp.broadcast_to(attn_mask, (B, Lq, Lk))
        in_specs.append(pl.BlockSpec((1, tq, tk), lambda b, qi, ki: (b, qi, ki)))
        args.append(attn_mask)

    out_shape = jax.ShapeDtypeStruct((B, Lq, Dv), query.dtype)
    out_spec = pl.BlockSpec((1, tq, Dv), lambda b, qi, ki: (b, qi, 0))

    itemsize = jnp.dtype(query.dtype).itemsize
    bytes_accessed = (query.size + key.size + value.size + B * Lq * Dv) * itemsize
    if has_mask:
        bytes_accessed += attn_mask.size * jnp.dtype(attn_mask.dtype).itemsize
    cost = pl.CostEstimate(
        flops=2 * B * Lq * Lk * (D + Dv),
        transcendentals=B * Lq * Lk,
        bytes_accessed=int(bytes_accessed),
    )

    kernel = functools.partial(_sdp_kernel, has_mask)

    return pl.pallas_call(
        kernel,
        out_shape=out_shape,
        grid_spec=pltpu.PrefetchScalarGridSpec(
            num_scalar_prefetch=0,
            grid=grid,
            in_specs=in_specs,
            out_specs=out_spec,
            scratch_shapes=[
                pltpu.VMEM((tq, 1), jnp.float32),    # running max m
                pltpu.VMEM((tq, 1), jnp.float32),    # running denom l
                pltpu.VMEM((tq, Dv), jnp.float32),   # f32 output accumulator
            ],
        ),
        compiler_params=pltpu.CompilerParams(
            dimension_semantics=("parallel", "parallel", "arbitrary")),
        cost_estimate=cost,
    )(*args)


def _reference(query, key, value, attn_mask=None):
    """Pure-JAX reference mirroring the PyTorch module (eval mode)."""
    s = jnp.einsum("bqd,bkd->bqk", query, key)
    if attn_mask is not None:
        s = s + attn_mask
    w = jax.nn.softmax(s, axis=-1)
    return jnp.einsum("bqk,bkd->bqd", w, value)


if __name__ == "__main__":
    # Small synthetic config: B = bsz*num_heads = 8, head_dim = 32.
    B, Lq, Lk, D = 8, 128, 256, 32

    key0 = jax.random.PRNGKey(0)
    k1, k2, k3, k4 = jax.random.split(key0, 4)
    q = jax.random.normal(k1, (B, Lq, D), jnp.float32)
    k = jax.random.normal(k2, (B, Lk, D), jnp.float32)
    v = jax.random.normal(k3, (B, Lk, D), jnp.float32)
    mask = 0.5 * jax.random.normal(k4, (B, Lq, Lk), jnp.float32)

    out = scaled_dot_product(q, k, v)                       # no mask
    out_m = scaled_dot_product(q, k, v, attn_mask=mask)     # additive mask
    jax.block_until_ready((out, out_m))

    ref = _reference(q, k, v)
    ref_m = _reference(q, k, v, mask)

    assert out.shape == (B, Lq, D)
    assert out_m.shape == (B, Lq, D)
    assert jnp.allclose(out, ref, atol=1e-4, rtol=1e-4), "mismatch (no mask)"
    assert jnp.allclose(out_m, ref_m, atol=1e-4, rtol=1e-4), "mismatch (mask)"

    print("KERNEL_OK")
</pallas_src>

<mosaic_0001>
module attributes {stable_mosaic.version = 11 : i64} {
  func.func @_sdp_kernel(%arg0: i32, %arg1: i32, %arg2: i32, %arg3: memref<1x128x32xf32, #tpu.memory_space<vmem>>, %arg4: memref<1x128x32xf32, #tpu.memory_space<vmem>>, %arg5: memref<1x128x32xf32, #tpu.memory_space<vmem>>, %arg6: memref<1x128x32xf32, #tpu.memory_space<vmem>>, %arg7: memref<128x1xf32, #tpu.memory_space<vmem>>, %arg8: memref<128x1xf32, #tpu.memory_space<vmem>>, %arg9: memref<128x32xf32, #tpu.memory_space<vmem>>) attributes {dimension_semantics = [#tpu.dimension_semantics<parallel>, #tpu.dimension_semantics<parallel>, #tpu.dimension_semantics<arbitrary>], iteration_bounds = array<i64: 8, 1, 2>, scalar_prefetch = 0 : i64, scratch_operands = 3 : i64, tpu.core_type = #tpu.core_type<tc>, window_params = [{transform_indices = @transform_0, window_bounds = array<i64: 1, 128, 32>}, {transform_indices = @transform_1, window_bounds = array<i64: 1, 128, 32>}, {transform_indices = @transform_2, window_bounds = array<i64: 1, 128, 32>}, {transform_indices = @transform_3, window_bounds = array<i64: 1, 128, 32>}]} {
    %c0_i32 = arith.constant 0 : i32
    %0 = arith.cmpi eq, %arg2, %c0_i32 : i32
    %1 = arith.extui %0 : i1 to i32
    %c0_i32_0 = arith.constant 0 : i32
    %2 = arith.cmpi ne, %1, %c0_i32_0 : i32
    scf.if %2 {
      %cst_25 = arith.constant 0xFF800000 : f32
      %35 = vector.broadcast %cst_25 : f32 to vector<128x1xf32>
      %c0_26 = arith.constant 0 : index
      %c0_27 = arith.constant 0 : index
      %36 = vector.load %arg7[%c0_26, %c0_27] : memref<128x1xf32, #tpu.memory_space<vmem>>, vector<128x1xf32>
      tpu.vector_store %arg7[%c0_26, %c0_27], %35 {strides = array<i32>} : memref<128x1xf32, #tpu.memory_space<vmem>>, vector<128x1xf32>,
      %cst_28 = arith.constant 0.000000e+00 : f32
      %37 = vector.broadcast %cst_28 : f32 to vector<128x1xf32>
      %c0_29 = arith.constant 0 : index
      %c0_30 = arith.constant 0 : index
      %38 = vector.load %arg8[%c0_29, %c0_30] : memref<128x1xf32, #tpu.memory_space<vmem>>, vector<128x1xf32>
      tpu.vector_store %arg8[%c0_29, %c0_30], %37 {strides = array<i32>} : memref<128x1xf32, #tpu.memory_space<vmem>>, vector<128x1xf32>,
      %cst_31 = arith.constant 0.000000e+00 : f32
      %39 = vector.broadcast %cst_31 : f32 to vector<128x32xf32>
      %c0_32 = arith.constant 0 : index
      %c0_33 = arith.constant 0 : index
      %40 = vector.load %arg9[%c0_32, %c0_33] : memref<128x32xf32, #tpu.memory_space<vmem>>, vector<128x32xf32>
      tpu.vector_store %arg9[%c0_32, %c0_33], %39 {strides = array<i32>} : memref<128x32xf32, #tpu.memory_space<vmem>>, vector<128x32xf32>,
    } else {
    }
    %c0 = arith.constant 0 : index
    %c0_1 = arith.constant 0 : index
    %c0_2 = arith.constant 0 : index
    %3 = vector.load %arg3[%c0, %c0_1, %c0_2] : memref<1x128x32xf32, #tpu.memory_space<vmem>>, vector<1x128x32xf32>
    %4 = vector.shape_cast %3 : vector<1x128x32xf32> to vector<128x32xf32>
    %c0_3 = arith.constant 0 : index
    %c0_4 = arith.constant 0 : index
    %c0_5 = arith.constant 0 : index
    %5 = vector.load %arg4[%c0_3, %c0_4, %c0_5] : memref<1x128x32xf32, #tpu.memory_space<vmem>>, vector<1x128x32xf32>
    %6 = vector.shape_cast %5 : vector<1x128x32xf32> to vector<128x32xf32>
    %c0_6 = arith.constant 0 : index
    %c0_7 = arith.constant 0 : index
    %c0_8 = arith.constant 0 : index
    %7 = vector.load %arg5[%c0_6, %c0_7, %c0_8] : memref<1x128x32xf32, #tpu.memory_space<vmem>>, vector<1x128x32xf32>
    %8 = vector.shape_cast %7 : vector<1x128x32xf32> to vector<128x32xf32>
    %cst = arith.constant dense<0.000000e+00> : vector<128x128xf32>
    %9 = tpu.matmul %4, %6, %cst {dimension_numbers = #tpu.dot_dimension_numbers<[1], [1], [0], [0], [0, 0, 1, 0], [], []>} : vector<128x32xf32>, vector<128x32xf32>, vector<128x128xf32> -> vector<128x128xf32>
    %c0_9 = arith.constant 0 : index
    %c0_10 = arith.constant 0 : index
    %10 = vector.load %arg7[%c0_9, %c0_10] : memref<128x1xf32, #tpu.memory_space<vmem>>, vector<128x1xf32>
    %cst_11 = arith.constant dense<0xFF800000> : vector<128xf32>
    %11 = vector.multi_reduction <maximumf>, %9, %cst_11 [1] : vector<128x128xf32> to vector<128xf32>
    %12 = vector.shape_cast %11 : vector<128xf32> to vector<128x1xf32>
    %13 = arith.maximumf %10, %12 : vector<128x1xf32>
    %14 = arith.subf %10, %13 : vector<128x1xf32>
    %15 = math.exp %14 : vector<128x1xf32>
    %16 = vector.broadcast %13 : vector<128x1xf32> to vector<128x128xf32>
    %17 = arith.subf %9, %16 : vector<128x128xf32>
    %18 = math.exp %17 : vector<128x128xf32>
    %c0_12 = arith.constant 0 : index
    %c0_13 = arith.constant 0 : index
    %19 = vector.load %arg8[%c0_12, %c0_13] : memref<128x1xf32, #tpu.memory_space<vmem>>, vector<128x1xf32>
    %20 = arith.mulf %15, %19 : vector<128x1xf32>
    %cst_14 = arith.constant dense<0.000000e+00> : vector<128xf32>
    %21 = vector.multi_reduction <add>, %18, %cst_14 [1] : vector<128x128xf32> to vector<128xf32>
    %22 = vector.shape_cast %21 : vector<128xf32> to vector<128x1xf32>
    %23 = arith.addf %20, %22 : vector<128x1xf32>
    %c0_15 = arith.constant 0 : index
    %c0_16 = arith.constant 0 : index
    %24 = vector.load %arg8[%c0_15, %c0_16] : memref<128x1xf32, #tpu.memory_space<vmem>>, vector<128x1xf32>
    tpu.vector_store %arg8[%c0_15, %c0_16], %23 {strides = array<i32>} : memref<128x1xf32, #tpu.memory_space<vmem>>, vector<128x1xf32>,
    %c0_17 = arith.constant 0 : index
    %c0_18 = arith.constant 0 : index
    %25 = vector.load %arg9[%c0_17, %c0_18] : memref<128x32xf32, #tpu.memory_space<vmem>>, vector<128x32xf32>
    %26 = vector.broadcast %15 : vector<128x1xf32> to vector<128x32xf32>
    %27 = arith.mulf %26, %25 : vector<128x32xf32>
    %cst_19 = arith.constant dense<0.000000e+00> : vector<128x32xf32>
    %28 = tpu.matmul %18, %8, %cst_19 {dimension_numbers = #tpu.dot_dimension_numbers<[1], [0], [0], [1], [0, 0, 1, 1], [], []>} : vector<128x128xf32>, vector<128x32xf32>, vector<128x32xf32> -> vector<128x32xf32>
    %29 = arith.addf %27, %28 : vector<128x32xf32>
    %c0_20 = arith.constant 0 : index
    %c0_21 = arith.constant 0 : index
    %30 = vector.load %arg9[%c0_20, %c0_21] : memref<128x32xf32, #tpu.memory_space<vmem>>, vector<128x32xf32>
    tpu.vector_store %arg9[%c0_20, %c0_21], %29 {strides = array<i32>} : memref<128x32xf32, #tpu.memory_space<vmem>>, vector<128x32xf32>,
    %c0_22 = arith.constant 0 : index
    %c0_23 = arith.constant 0 : index
    %31 = vector.load %arg7[%c0_22, %c0_23] : memref<128x1xf32, #tpu.memory_space<vmem>>, vector<128x1xf32>
    tpu.vector_store %arg7[%c0_22, %c0_23], %13 {strides = array<i32>} : memref<128x1xf32, #tpu.memory_space<vmem>>, vector<128x1xf32>,
    %c1_i32 = arith.constant 1 : i32
    %32 = arith.cmpi eq, %arg2, %c1_i32 : i32
    %33 = arith.extui %32 : i1 to i32
    %c0_i32_24 = arith.constant 0 : i32
    %34 = arith.cmpi ne, %33, %c0_i32_24 : i32
    scf.if %34 {
      %c0_25 = arith.constant 0 : index
      %c0_26 = arith.constant 0 : index
      %35 = vector.load %arg9[%c0_25, %c0_26] : memref<128x32xf32, #tpu.memory_space<vmem>>, vector<128x32xf32>
      %c0_27 = arith.constant 0 : index
      %c0_28 = arith.constant 0 : index
      %36 = vector.load %arg8[%c0_27, %c0_28] : memref<128x1xf32, #tpu.memory_space<vmem>>, vector<128x1xf32>
      %37 = vector.broadcast %36 : vector<128x1xf32> to vector<128x32xf32>
      %38 = arith.divf %35, %37 : vector<128x32xf32>
      %c0_29 = arith.constant 0 : index
      %c0_30 = arith.constant 0 : index
      %c0_31 = arith.constant 0 : index
      %39 = vector.load %arg6[%c0_29, %c0_30, %c0_31] : memref<1x128x32xf32, #tpu.memory_space<vmem>>, vector<1x128x32xf32>
      %40 = vector.shape_cast %39 : vector<1x128x32xf32> to vector<128x32xf32>
      %41 = vector.shape_cast %38 : vector<128x32xf32> to vector<1x128x32xf32>
      tpu.vector_store %arg6[%c0_29, %c0_30, %c0_31], %41 {strides = array<i32>} : memref<1x128x32xf32, #tpu.memory_space<vmem>>, vector<1x128x32xf32>,
    } else {
    }
    return
  }
  func.func @transform_0(%arg0: i32, %arg1: i32, %arg2: i32) -> (i32, i32, i32) {
    %c0_i32 = arith.constant 0 : i32
    %c0_i32_0 = arith.constant 0 : i32
    return %arg0, %arg1, %c0_i32 : i32, i32, i32
  }
  func.func @transform_1(%arg0: i32, %arg1: i32, %arg2: i32) -> (i32, i32, i32) {
    %c0_i32 = arith.constant 0 : i32
    %c0_i32_0 = arith.constant 0 : i32
    return %arg0, %arg2, %c0_i32 : i32, i32, i32
  }
  func.func @transform_2(%arg0: i32, %arg1: i32, %arg2: i32) -> (i32, i32, i32) {
    %c0_i32 = arith.constant 0 : i32
    %c0_i32_0 = arith.constant 0 : i32
    return %arg0, %arg2, %c0_i32 : i32, i32, i32
  }
  func.func @transform_3(%arg0: i32, %arg1: i32, %arg2: i32) -> (i32, i32, i32) {
    %c0_i32 = arith.constant 0 : i32
    %c0_i32_0 = arith.constant 0 : i32
    return %arg0, %arg1, %c0_i32 : i32, i32, i32
  }
}

</mosaic_0001>

<llo_original>
// kernel: tpu_custom_call.1
$region0: #{tpu_custom_call.1}
  #allocation0 [shape = 'u32[]', space=smem, size = 0x4, offset = 0x4, fixed_abs, tag = 'smem constant byte address 0x4 - core index']
  #allocation1 [shape = 'u32[144,128]{1,0:T(1,128)}', space=vmem, size = 0x12000, scoped, tag = 'internal scratch']
  #allocation2 [shape = 'f32[128,1]{1,0:T(8,128)}', space=vmem, size = 0x10000, scoped, tag = 'scratch operand']
  #allocation3 [shape = 'f32[128,1]{1,0:T(8,128)}', space=vmem, size = 0x10000, scoped, tag = 'scratch operand']
  #allocation4 [shape = 'f32[128,32]{1,0:T(8,128)}', space=vmem, size = 0x10000, scoped, tag = 'scratch operand']
  %s0 = inlined_call_operand.vmem [shape: f32[8,128,32], index: 0, kind: input, shape index: {}]
  %s1 = inlined_call_operand.vmem [shape: f32[8,256,32], index: 1, kind: input, shape index: {}]
  %s2 = inlined_call_operand.vmem [shape: f32[8,256,32], index: 2, kind: input, shape index: {}]
  %s3 = inlined_call_operand.vmem [shape: f32[8,128,32], index: 3, kind: output, shape index: {}]
  %s4 = sld [smem:[#allocation0]]
  $region53: #{tpu_custom_call.1} parent=0
    _
  %s6 = ssub.s32 1, %s4
  %s7 = scalar_select 0, %s6, %s4
  loop: start=0, step=1, limit=18
  $region2: #{tpu_custom_call.1} parent=0 // loop_pre_header
    _
  $region3: #{tpu_custom_call.1} parent=0 // loop_header
    %s9 = sphi 0, %s13
    %p10 = scmp.ge.s32.totalorder %s9, 18
    %s16 = sphi 0, %s35
    %s17 = sphi 0, %s31
    %s18 = sphi 0, %s27
    %s19 = sphi 0, %s16
    %s20 = sphi 0, %s17
    %s21 = sphi 0, %s18
    %s22 = sphi 0, %s19
    %s23 = sphi 0, %s20
    %s24 = sphi 0, %s21
    %s40 = sphi 0, %s42
    %s43 = sphi 0, %s40
    %s44 = sphi 0, %s43
    %s60 = sphi 0, %s44
    %s68 = sphi 0, %s70
    %s71 = sphi 0, %s68
    %s72 = sphi 0, %s71
    %s88 = sphi 0, %s72
    %s96 = sphi 0, %s98
    %s99 = sphi 0, %s96
    %s100 = sphi 0, %s99
    %s116 = sphi 0, %s100
    %s124 = sphi 0, %s126
    %s127 = sphi 0, %s124
    %s128 = sphi 0, %s127
    %s144 = sphi 0, %s128
  $region4: #{tpu_custom_call.1} parent=0 // loop_header_branch
    %12 = sbr.rel (%p10) target = $region8
  $region5: #{tpu_custom_call.1} parent=0 // loop_body
    %s14 = ssub.s32 %s9, 1
    %s15 = ssub.s32 %s9, 2
    %s25 = sadd.s32 1, %s18
    %p26 = scmp.ge.s32.totalorder %s25, 2
    %s27 = scalar_select %p26, 0, %s25
    %s28 = sadd.s32 1, %s17
    %s29 = scalar_select %p26, %s28, %s17
    %p30 = scmp.ge.s32.totalorder %s29, 1
    %s31 = scalar_select %p30, 0, %s29
    %s32 = sadd.s32 1, %s16
    %s33 = scalar_select %p30, %s32, %s16
    %p34 = scmp.ge.s32.totalorder %s33, 8
    %s35 = scalar_select %p34, 0, %s33
    %s36 = ssub.s32 %s16, %s35
    %s37 = ssub.s32 %s17, %s31
    %s38 = sor.u32 %s36, %s37
    %p39 = scmp.eq.s32.totalorder %s38, 0
    %s41 = sadd.s32 %s40, 1
    %s42 = scalar_select %p39, %s40, %s41
    %p45 = pneg %p39
    %p46 = scmp.eq.s32.totalorder %s9, 15
    %p47 = por %p45, %p46
    %p48 = scmp.ne.s32.totalorder %s40, %s43
    %p49 = scmp.eq.s32.totalorder %s9, 0
    %p50 = por %p48, %p49
    %p51 = scmp.ne.s32.totalorder %s40, %s43
    %p52 = scmp.eq.s32.totalorder %s14, 15
    %p53 = por %p51, %p52
    %p54 = scmp.ne.s32.totalorder %s43, %s44
    %p55 = scmp.eq.s32.totalorder %s14, 0
    %p56 = por %p54, %p55
    %p57 = scmp.ne.s32.totalorder %s43, %s44
    %p58 = scmp.eq.s32.totalorder %s15, 15
    %p59 = por %p57, %p58
    %p61 = scmp.ne.s32.totalorder %s44, %s60
    %p62 = scmp.eq.s32.totalorder %s15, 0
    %p63 = por %p61, %p62
    %s64 = ssub.s32 %s16, %s35
    %s65 = ssub.s32 %s18, %s27
    %s66 = sor.u32 %s64, %s65
    %p67 = scmp.eq.s32.totalorder %s66, 0
    %s69 = sadd.s32 %s68, 1
    %s70 = scalar_select %p67, %s68, %s69
    %p73 = pneg %p67
    %p74 = scmp.eq.s32.totalorder %s9, 15
    %p75 = por %p73, %p74
    %p76 = scmp.ne.s32.totalorder %s68, %s71
    %p77 = scmp.eq.s32.totalorder %s9, 0
    %p78 = por %p76, %p77
    %p79 = scmp.ne.s32.totalorder %s68, %s71
    %p80 = scmp.eq.s32.totalorder %s14, 15
    %p81 = por %p79, %p80
    %p82 = scmp.ne.s32.totalorder %s71, %s72
    %p83 = scmp.eq.s32.totalorder %s14, 0
    %p84 = por %p82, %p83
    %p85 = scmp.ne.s32.totalorder %s71, %s72
    %p86 = scmp.eq.s32.totalorder %s15, 15
    %p87 = por %p85, %p86
    %p89 = scmp.ne.s32.totalorder %s72, %s88
    %p90 = scmp.eq.s32.totalorder %s15, 0
    %p91 = por %p89, %p90
    %s92 = ssub.s32 %s16, %s35
    %s93 = ssub.s32 %s18, %s27
    %s94 = sor.u32 %s92, %s93
    %p95 = scmp.eq.s32.totalorder %s94, 0
    %s97 = sadd.s32 %s96, 1
    %s98 = scalar_select %p95, %s96, %s97
    %p101 = pneg %p95
    %p102 = scmp.eq.s32.totalorder %s9, 15
    %p103 = por %p101, %p102
    %p104 = scmp.ne.s32.totalorder %s96, %s99
    %p105 = scmp.eq.s32.totalorder %s9, 0
    %p106 = por %p104, %p105
    %p107 = scmp.ne.s32.totalorder %s96, %s99
    %p108 = scmp.eq.s32.totalorder %s14, 15
    %p109 = por %p107, %p108
    %p110 = scmp.ne.s32.totalorder %s99, %s100
    %p111 = scmp.eq.s32.totalorder %s14, 0
    %p112 = por %p110, %p111
    %p113 = scmp.ne.s32.totalorder %s99, %s100
    %p114 = scmp.eq.s32.totalorder %s15, 15
    %p115 = por %p113, %p114
    %p117 = scmp.ne.s32.totalorder %s100, %s116
    %p118 = scmp.eq.s32.totalorder %s15, 0
    %p119 = por %p117, %p118
    %s120 = ssub.s32 %s16, %s35
    %s121 = ssub.s32 %s17, %s31
    %s122 = sor.u32 %s120, %s121
    %p123 = scmp.eq.s32.totalorder %s122, 0
    %s125 = sadd.s32 %s124, 1
    %s126 = scalar_select %p123, %s124, %s125
    %p129 = pneg %p123
    %p130 = scmp.eq.s32.totalorder %s9, 15
    %p131 = por %p129, %p130
    %p132 = scmp.ne.s32.totalorder %s124, %s127
    %p133 = scmp.eq.s32.totalorder %s9, 0
    %p134 = por %p132, %p133
    %p135 = scmp.ne.s32.totalorder %s124, %s127
    %p136 = scmp.eq.s32.totalorder %s14, 15
    %p137 = por %p135, %p136
    %p138 = scmp.ne.s32.totalorder %s127, %s128
    %p139 = scmp.eq.s32.totalorder %s14, 0
    %p140 = por %p138, %p139
    %p141 = scmp.ne.s32.totalorder %s127, %s128
    %p142 = scmp.eq.s32.totalorder %s15, 15
    %p143 = por %p141, %p142
    %p145 = scmp.ne.s32.totalorder %s128, %s144
    %p146 = scmp.eq.s32.totalorder %s15, 0
    %p147 = por %p145, %p146
    %p148 = scmp.le.s32.totalorder 1, %s9
    %p149 = scmp.lt.s32.totalorder %s9, 17
    %p150 = pnand %p148, %p149
    %p151 = pneg %p150
    // Predicated region
    $region9: #{tpu_custom_call.1} parent=5 // pred_check
      _
    $region10: #{tpu_custom_call.1} parent=5 // pred_check_branch
      %153 = sbr.rel (%p150) target = $region12
    $region11: #{tpu_custom_call.1} parent=5 // pred_region
      %s154 = ssub.s32 %s9, 1
    $region12: #{tpu_custom_call.1} parent=5 // pred_fallthru
      _
    %p155 = scmp.lt.s32.totalorder %s9, 16
    // Predicated region
    $region13: #{tpu_custom_call.1} parent=5 // pred_check
      %p156 = pneg %p155
    $region14: #{tpu_custom_call.1} parent=5 // pred_check_branch
      %158 = sbr.rel (%p156) target = $region16
    $region15: #{tpu_custom_call.1} parent=5 // pred_region
      // Predicated region
      $region17: #{tpu_custom_call.1} parent=15 // pred_check
        %p159 = pneg %p50
      $region18: #{tpu_custom_call.1} parent=15 // pred_check_branch
        %161 = sbr.rel (%p159) target = $region20
      $region19: #{tpu_custom_call.1} parent=15 // pred_region
        %s162 = smul.u32 16, %s17
        %p163 = scmp.lt.s32.totalorder %s16, 7
        %s164 = scalar_select %p163, %s16, 7
        %p165 = scmp.lt.s32.totalorder %s162, 15
        %s166 = scalar_select %p165, %s162, 15
        %s167 = smul.addr %s164, 16
        %s168 = sadd.s32 %s166, %s167
        %s169 = smul.addr %s168, 8
        %s170 = scalar_lea.vmem %s0, %s169
        %s171 = smul.u32 16, %s17
      $region20: #{tpu_custom_call.1} parent=15 // pred_fallthru
        _
      // Predicated region
      $region21: #{tpu_custom_call.1} parent=15 // pred_check
        %p172 = pneg %p78
      $region22: #{tpu_custom_call.1} parent=15 // pred_check_branch
        %174 = sbr.rel (%p172) target = $region24
      $region23: #{tpu_custom_call.1} parent=15 // pred_region
        %s175 = smul.u32 16, %s18
        %p176 = scmp.lt.s32.totalorder %s16, 7
        %s177 = scalar_select %p176, %s16, 7
        %p178 = scmp.lt.s32.totalorder %s175, 31
        %s179 = scalar_select %p178, %s175, 31
        %s180 = smul.addr %s177, 32
        %s181 = sadd.s32 %s179, %s180
        %s182 = smul.addr %s181, 8
        %s183 = scalar_lea.vmem %s1, %s182
        %s184 = smul.u32 16, %s18
      $region24: #{tpu_custom_call.1} parent=15 // pred_fallthru
        _
      // Predicated region
      $region25: #{tpu_custom_call.1} parent=15 // pred_check
        %p185 = pneg %p106
      $region26: #{tpu_custom_call.1} parent=15 // pred_check_branch
        %187 = sbr.rel (%p185) target = $region28
      $region27: #{tpu_custom_call.1} parent=15 // pred_region
        %s188 = smul.u32 16, %s18
        %p189 = scmp.lt.s32.totalorder %s16, 7
        %s190 = scalar_select %p189, %s16, 7
        %p191 = scmp.lt.s32.totalorder %s188, 31
        %s192 = scalar_select %p191, %s188, 31
        %s193 = smul.addr %s190, 32
        %s194 = sadd.s32 %s192, %s193
        %s195 = smul.addr %s194, 8
        %s196 = scalar_lea.vmem %s2, %s195
        %s197 = smul.u32 16, %s18
      $region28: #{tpu_custom_call.1} parent=15 // pred_fallthru
        _
    $region16: #{tpu_custom_call.1} parent=5 // pred_fallthru
      _
    %p198 = scmp.le.s32.totalorder 1, %s9
    %p199 = scmp.lt.s32.totalorder %s9, 17
    %p200 = pnand %p198, %p199
    %p201 = pneg %p200
    // Predicated region
    $region29: #{tpu_custom_call.1} parent=5 // pred_check
      _
    $region30: #{tpu_custom_call.1} parent=5 // pred_check_branch
      %203 = sbr.rel (%p200) target = $region32
    $region31: #{tpu_custom_call.1} parent=5 // pred_region
      %s204 = ssub.s32 %s9, 1
      %s205 = smul.u32 16, %s20
      %p206 = scmp.lt.s32.totalorder %s19, 7
      %s207 = scalar_select %p206, %s19, 7
      %p208 = scmp.lt.s32.totalorder %s205, 15
      %s209 = scalar_select %p208, %s205, 15
      %s210 = smul.addr %s207, 16
      %s211 = sadd.s32 %s209, %s210
      %s212 = smul.addr %s211, 8
      %s213 = scalar_lea.vmem %s0, %s212
      %p214 = pneg %p56
      %p215 = pneg %p53
      %s216 = smul.u32 16, %s21
      %p217 = scmp.lt.s32.totalorder %s19, 7
      %s218 = scalar_select %p217, %s19, 7
      %p219 = scmp.lt.s32.totalorder %s216, 31
      %s220 = scalar_select %p219, %s216, 31
      %s221 = smul.addr %s218, 32
      %s222 = sadd.s32 %s220, %s221
      %s223 = smul.addr %s222, 8
      %s224 = scalar_lea.vmem %s1, %s223
      %p225 = pneg %p84
      %p226 = pneg %p81
      %s227 = smul.u32 16, %s21
      %p228 = scmp.lt.s32.totalorder %s19, 7
      %s229 = scalar_select %p228, %s19, 7
      %p230 = scmp.lt.s32.totalorder %s227, 31
      %s231 = scalar_select %p230, %s227, 31
      %s232 = smul.addr %s229, 32
      %s233 = sadd.s32 %s231, %s232
      %s234 = smul.addr %s233, 8
      %s235 = scalar_lea.vmem %s2, %s234
      %p236 = pneg %p112
      %p237 = pneg %p109
      %p238 = pneg %p140
      %p239 = pneg %p137
      %s240 = smul.u32 16, %s20
      %p241 = scmp.lt.s32.totalorder %s19, 7
      %s242 = scalar_select %p241, %s19, 7
      %p243 = scmp.lt.s32.totalorder %s240, 15
      %s244 = scalar_select %p243, %s240, 15
      %s245 = smul.addr %s242, 16
      %s246 = sadd.s32 %s244, %s245
      %s247 = smul.addr %s246, 8
      %s248 = scalar_lea.vmem %s3, %s247
      %s249 = smul.u32 16, %s20
      %p250 = scmp.lt.s32.totalorder %s19, 7
      %s251 = scalar_select %p250, %s19, 7
      %p252 = scmp.lt.s32.totalorder %s249, 15
      %s253 = scalar_select %p252, %s249, 15
      %s254 = smul.addr %s251, 16
      %s255 = sadd.s32 %s253, %s254
      %s256 = smul.addr %s255, 8
      %s257 = scalar_lea.vmem %s0, %s256
      %s258 = smul.u32 16, %s20
      %s259 = smul.u32 16, %s21
      %p260 = scmp.lt.s32.totalorder %s19, 7
      %s261 = scalar_select %p260, %s19, 7
      %p262 = scmp.lt.s32.totalorder %s259, 31
      %s263 = scalar_select %p262, %s259, 31
      %s264 = smul.addr %s261, 32
      %s265 = sadd.s32 %s263, %s264
      %s266 = smul.addr %s265, 8
      %s267 = scalar_lea.vmem %s1, %s266
      %s268 = smul.u32 16, %s21
      %s269 = smul.u32 16, %s21
      %p270 = scmp.lt.s32.totalorder %s19, 7
      %s271 = scalar_select %p270, %s19, 7
      %p272 = scmp.lt.s32.totalorder %s269, 31
      %s273 = scalar_select %p272, %s269, 31
      %s274 = smul.addr %s271, 32
      %s275 = sadd.s32 %s273, %s274
      %s276 = smul.addr %s275, 8
      %s277 = scalar_lea.vmem %s2, %s276
      %s278 = smul.u32 16, %s21
      %s279 = smul.u32 16, %s20
      %p280 = scmp.lt.s32.totalorder %s19, 7
      %s281 = scalar_select %p280, %s19, 7
      %p282 = scmp.lt.s32.totalorder %s279, 15
      %s283 = scalar_select %p282, %s279, 15
      %s284 = smul.addr %s281, 16
      %s285 = sadd.s32 %s283, %s284
      %s286 = smul.addr %s285, 8
      %s287 = scalar_lea.vmem %s3, %s286
      %s288 = smul.u32 16, %s20
      %p289 = scmp.eq.s32.totalorder %s21, 0
      // Predicated region
      $region33: #{tpu_custom_call.1} parent=31 // pred_check
        %p290 = pneg %p289
      $region34: #{tpu_custom_call.1} parent=31 // pred_check_branch
        %292 = sbr.rel (%p290) target = $region36
      $region35: #{tpu_custom_call.1} parent=31 // pred_region
        %vm293 = vcmask 7168
        %294 = vst.msk [vmem:[#allocation2] sm:$0xff] %vm293, -inf
        %295 = vst.msk [vmem:[#allocation2 + $0x8] sm:$0xff] %vm293, -inf
        %296 = vst.msk [vmem:[#allocation2 + $0x10] sm:$0xff] %vm293, -inf
        %297 = vst.msk [vmem:[#allocation2 + $0x18] sm:$0xff] %vm293, -inf
        %298 = vst.msk [vmem:[#allocation2 + $0x20] sm:$0xff] %vm293, -inf
        %299 = vst.msk [vmem:[#allocation2 + $0x28] sm:$0xff] %vm293, -inf
        %300 = vst.msk [vmem:[#allocation2 + $0x30] sm:$0xff] %vm293, -inf
        %301 = vst.msk [vmem:[#allocation2 + $0x38] sm:$0xff] %vm293, -inf
        %302 = vst.msk [vmem:[#allocation2 + $0x40] sm:$0xff] %vm293, -inf
        %303 = vst.msk [vmem:[#allocation2 + $0x48] sm:$0xff] %vm293, -inf
        %304 = vst.msk [vmem:[#allocation2 + $0x50] sm:$0xff] %vm293, -inf
        %305 = vst.msk [vmem:[#allocation2 + $0x58] sm:$0xff] %vm293, -inf
        %306 = vst.msk [vmem:[#allocation2 + $0x60] sm:$0xff] %vm293, -inf
        %307 = vst.msk [vmem:[#allocation2 + $0x68] sm:$0xff] %vm293, -inf
        %308 = vst.msk [vmem:[#allocation2 + $0x70] sm:$0xff] %vm293, -inf
        %309 = vst.msk [vmem:[#allocation2 + $0x78] sm:$0xff] %vm293, -inf
        %310 = vst.msk [vmem:[#allocation3] sm:$0xff] %vm293, 0.0
        %311 = vst.msk [vmem:[#allocation3 + $0x8] sm:$0xff] %vm293, 0.0
        %312 = vst.msk [vmem:[#allocation3 + $0x10] sm:$0xff] %vm293, 0.0
        %313 = vst.msk [vmem:[#allocation3 + $0x18] sm:$0xff] %vm293, 0.0
        %314 = vst.msk [vmem:[#allocation3 + $0x20] sm:$0xff] %vm293, 0.0
        %315 = vst.msk [vmem:[#allocation3 + $0x28] sm:$0xff] %vm293, 0.0
        %316 = vst.msk [vmem:[#allocation3 + $0x30] sm:$0xff] %vm293, 0.0
        %317 = vst.msk [vmem:[#allocation3 + $0x38] sm:$0xff] %vm293, 0.0
        %318 = vst.msk [vmem:[#allocation3 + $0x40] sm:$0xff] %vm293, 0.0
        %319 = vst.msk [vmem:[#allocation3 + $0x48] sm:$0xff] %vm293, 0.0
        %320 = vst.msk [vmem:[#allocation3 + $0x50] sm:$0xff] %vm293, 0.0
        %321 = vst.msk [vmem:[#allocation3 + $0x58] sm:$0xff] %vm293, 0.0
        %322 = vst.msk [vmem:[#allocation3 + $0x60] sm:$0xff] %vm293, 0.0
        %323 = vst.msk [vmem:[#allocation3 + $0x68] sm:$0xff] %vm293, 0.0
        %324 = vst.msk [vmem:[#allocation3 + $0x70] sm:$0xff] %vm293, 0.0
        %325 = vst.msk [vmem:[#allocation3 + $0x78] sm:$0xff] %vm293, 0.0
        %vm326 = vcmask 261120
        %327 = vst.msk [vmem:[#allocation4] sm:$0xff] %vm326, 0.0
        %328 = vst.msk [vmem:[#allocation4 + $0x8] sm:$0xff] %vm326, 0.0
        %329 = vst.msk [vmem:[#allocation4 + $0x10] sm:$0xff] %vm326, 0.0
        %330 = vst.msk [vmem:[#allocation4 + $0x18] sm:$0xff] %vm326, 0.0
        %331 = vst.msk [vmem:[#allocation4 + $0x20] sm:$0xff] %vm326, 0.0
        %332 = vst.msk [vmem:[#allocation4 + $0x28] sm:$0xff] %vm326, 0.0
        %333 = vst.msk [vmem:[#allocation4 + $0x30] sm:$0xff] %vm326, 0.0
        %334 = vst.msk [vmem:[#allocation4 + $0x38] sm:$0xff] %vm326, 0.0
        %335 = vst.msk [vmem:[#allocation4 + $0x40] sm:$0xff] %vm326, 0.0
        %336 = vst.msk [vmem:[#allocation4 + $0x48] sm:$0xff] %vm326, 0.0
        %337 = vst.msk [vmem:[#allocation4 + $0x50] sm:$0xff] %vm326, 0.0
        %338 = vst.msk [vmem:[#allocation4 + $0x58] sm:$0xff] %vm326, 0.0
        %339 = vst.msk [vmem:[#allocation4 + $0x60] sm:$0xff] %vm326, 0.0
        %340 = vst.msk [vmem:[#allocation4 + $0x68] sm:$0xff] %vm326, 0.0
        %341 = vst.msk [vmem:[#allocation4 + $0x70] sm:$0xff] %vm326, 0.0
        %342 = vst.msk [vmem:[#allocation4 + $0x78] sm:$0xff] %vm326, 0.0
      $region36: #{tpu_custom_call.1} parent=31 // pred_fallthru
        _
      %v343 = vld [vmem:[%s257] sm:$0xff]
      %v344 = vld [vmem:[%s257 + $0x8] sm:$0xff]
      %v345 = vld [vmem:[%s257 + $0x10] sm:$0xff]
      %v346 = vld [vmem:[%s257 + $0x18] sm:$0xff]
      %v347 = vld [vmem:[%s257 + $0x20] sm:$0xff]
      %v348 = vld [vmem:[%s257 + $0x28] sm:$0xff]
      %v349 = vld [vmem:[%s257 + $0x30] sm:$0xff]
      %v350 = vld [vmem:[%s257 + $0x38] sm:$0xff]
      %v351 = vld [vmem:[%s257 + $0x40] sm:$0xff]
      %v352 = vld [vmem:[%s257 + $0x48] sm:$0xff]
      %v353 = vld [vmem:[%s257 + $0x50] sm:$0xff]
      %v354 = vld [vmem:[%s257 + $0x58] sm:$0xff]
      %v355 = vld [vmem:[%s257 + $0x60] sm:$0xff]
      %v356 = vld [vmem:[%s257 + $0x68] sm:$0xff]
      %v357 = vld [vmem:[%s257 + $0x70] sm:$0xff]
      %v358 = vld [vmem:[%s257 + $0x78] sm:$0xff]
      %v359 = vld [vmem:[%s267] sm:$0xff]
      %v360 = vld [vmem:[%s267 + $0x8] sm:$0xff]
      %v361 = vld [vmem:[%s267 + $0x10] sm:$0xff]
      %v362 = vld [vmem:[%s267 + $0x18] sm:$0xff]
      %v363 = vld [vmem:[%s267 + $0x20] sm:$0xff]
      %v364 = vld [vmem:[%s267 + $0x28] sm:$0xff]
      %v365 = vld [vmem:[%s267 + $0x30] sm:$0xff]
      %v366 = vld [vmem:[%s267 + $0x38] sm:$0xff]
      %v367 = vld [vmem:[%s267 + $0x40] sm:$0xff]
      %v368 = vld [vmem:[%s267 + $0x48] sm:$0xff]
      %v369 = vld [vmem:[%s267 + $0x50] sm:$0xff]
      %v370 = vld [vmem:[%s267 + $0x58] sm:$0xff]
      %v371 = vld [vmem:[%s267 + $0x60] sm:$0xff]
      %v372 = vld [vmem:[%s267 + $0x68] sm:$0xff]
      %v373 = vld [vmem:[%s267 + $0x70] sm:$0xff]
      %v374 = vld [vmem:[%s267 + $0x78] sm:$0xff]
      %v375 = vld [vmem:[%s277] sm:$0xff]
      %v376 = vld [vmem:[%s277 + $0x8] sm:$0xff]
      %v377 = vld [vmem:[%s277 + $0x10] sm:$0xff]
      %v378 = vld [vmem:[%s277 + $0x18] sm:$0xff]
      %v379 = vld [vmem:[%s277 + $0x20] sm:$0xff]
      %v380 = vld [vmem:[%s277 + $0x28] sm:$0xff]
      %v381 = vld [vmem:[%s277 + $0x30] sm:$0xff]
      %v382 = vld [vmem:[%s277 + $0x38] sm:$0xff]
      %v383 = vld [vmem:[%s277 + $0x40] sm:$0xff]
      %v384 = vld [vmem:[%s277 + $0x48] sm:$0xff]
      %v385 = vld [vmem:[%s277 + $0x50] sm:$0xff]
      %v386 = vld [vmem:[%s277 + $0x58] sm:$0xff]
      %v387 = vld [vmem:[%s277 + $0x60] sm:$0xff]
      %v388 = vld [vmem:[%s277 + $0x68] sm:$0xff]
      %v389 = vld [vmem:[%s277 + $0x70] sm:$0xff]
      %v390 = vld [vmem:[%s277 + $0x78] sm:$0xff]
      %vm391 = vcmask 261120
      %v393 = vsel %vm391, %v343, 0
      %v396 = vsel %vm391, %v344, 0
      %v399 = vsel %vm391, %v345, 0
      %v402 = vsel %vm391, %v346, 0
      %v405 = vsel %vm391, %v347, 0
      %v408 = vsel %vm391, %v348, 0
      %v411 = vsel %vm391, %v349, 0
      %v414 = vsel %vm391, %v350, 0
      %v417 = vsel %vm391, %v351, 0
      %v420 = vsel %vm391, %v352, 0
      %v423 = vsel %vm391, %v353, 0
      %v426 = vsel %vm391, %v354, 0
      %v429 = vsel %vm391, %v355, 0
      %v432 = vsel %vm391, %v356, 0
      %v435 = vsel %vm391, %v357, 0
      %v438 = vsel %vm391, %v358, 0
      %v441 = vsel %vm391, %v359, 0
      %v444 = vsel %vm391, %v360, 0
      %v447 = vsel %vm391, %v361, 0
      %v450 = vsel %vm391, %v362, 0
      %v453 = vsel %vm391, %v363, 0
      %v456 = vsel %vm391, %v364, 0
      %v459 = vsel %vm391, %v365, 0
      %v462 = vsel %vm391, %v366, 0
      %v465 = vsel %vm391, %v367, 0
      %v468 = vsel %vm391, %v368, 0
      %v471 = vsel %vm391, %v369, 0
      %v474 = vsel %vm391, %v370, 0
      %v477 = vsel %vm391, %v371, 0
      %v480 = vsel %vm391, %v372, 0
      %v483 = vsel %vm391, %v373, 0
      %v486 = vsel %vm391, %v374, 0
      %488 = vmatprep.subr.mxu0 0.0
      %489 = vmatpush1.xpose.msra.mxu0 %v486
      %490 = vmatprep.subr.mxu0 0.0
      %491 = vmatpush1.xpose.msra.mxu0 %v483
      %492 = vmatprep.subr.mxu0 0.0
      %493 = vmatpush1.xpose.msra.mxu0 %v480
      %494 = vmatprep.subr.mxu0 0.0
      %495 = vmatpush1.xpose.msra.mxu0 %v477
      %496 = vmatprep.subr.mxu0 0.0
      %497 = vmatpush1.xpose.msra.mxu0 %v474
      %498 = vmatprep.subr.mxu0 0.0
      %499 = vmatpush1.xpose.msra.mxu0 %v471
      %500 = vmatprep.subr.mxu0 0.0
      %501 = vmatpush1.xpose.msra.mxu0 %v468
      %502 = vmatprep.subr.mxu0 0.0
      %503 = vmatpush1.xpose.msra.mxu0 %v465
      %504 = vmatprep.subr.mxu0 0.0
      %505 = vmatpush1.xpose.msra.mxu0 %v462
      %506 = vmatprep.subr.mxu0 0.0
      %507 = vmatpush1.xpose.msra.mxu0 %v459
      %508 = vmatprep.subr.mxu0 0.0
      %509 = vmatpush1.xpose.msra.mxu0 %v456
      %510 = vmatprep.subr.mxu0 0.0
      %511 = vmatpush1.xpose.msra.mxu0 %v453
      %512 = vmatprep.subr.mxu0 0.0
      %513 = vmatpush1.xpose.msra.mxu0 %v450
      %514 = vmatprep.subr.mxu0 0.0
      %515 = vmatpush1.xpose.msra.mxu0 %v447
      %516 = vmatprep.subr.mxu0 0.0
      %517 = vmatpush1.xpose.msra.mxu0 %v444
      %518 = vmatprep.subr.mxu0 0.0
      %519 = vmatpush1.xpose.msra.mxu0 %v441
      %520 = vmatprep.subr.mxu0 0.0
      %521 = vmatpush2.xpose.msra.mxu0 0.0
      %522 = vmatprep.subr.mxu0 0.0
      %523 = vmatpush2.xpose.msra.mxu0 0.0
      %524 = vmatprep.subr.mxu0 0.0
      %525 = vmatpush2.xpose.msra.mxu0 0.0
      %526 = vmatprep.subr.mxu0 0.0
      %527 = vmatpush2.xpose.msra.mxu0 0.0
      %528 = vmatprep.subr.mxu0 0.0
      %529 = vmatpush2.xpose.msra.mxu0 0.0
      %530 = vmatprep.subr.mxu0 0.0
      %531 = vmatpush2.xpose.msra.mxu0 0.0
      %532 = vmatprep.subr.mxu0 0.0
      %533 = vmatpush2.xpose.msra.mxu0 0.0
      %534 = vmatprep.subr.mxu0 0.0
      %535 = vmatpush2.xpose.msra.mxu0 0.0
      %536 = vmatprep.subr.mxu0 0.0
      %537 = vmatpush2.xpose.msra.mxu0 0.0
      %538 = vmatprep.subr.mxu0 0.0
      %539 = vmatpush2.xpose.msra.mxu0 0.0
      %540 = vmatprep.subr.mxu0 0.0
      %541 = vmatpush2.xpose.msra.mxu0 0.0
      %542 = vmatprep.subr.mxu0 0.0
      %543 = vmatpush2.xpose.msra.mxu0 0.0
      %544 = vmatprep.subr.mxu0 0.0
      %545 = vmatpush2.xpose.msra.mxu0 0.0
      %546 = vmatprep.subr.mxu0 0.0
      %547 = vmatpush2.xpose.msra.mxu0 0.0
      %548 = vmatprep.subr.mxu0 0.0
      %549 = vmatpush2.xpose.msra.mxu0 0.0
      %550 = vmatprep.subr.mxu0 0.0
      %551 = vmatpush2.xpose.msra.mxu0 0.0
      %552 = vmatprep.mubr.f32.mxu0 0.0
      %553 = vmatmul.mubr.f32.gmra.mxu0 %v393
      %v554 = vpop.f32.mrf.mxu0
      %v555 = vadd.f32 0.0, %v554
      %v556 = vpop.f32.mrf.mxu0
      %557 = vmatprep.mubr.f32.mxu0 0.0
      %558 = vmatmul.mubr.f32.gmra.mxu0 %v396
      %v559 = vpop.f32.mrf.mxu0
      %v560 = vadd.f32 0.0, %v559
      %v561 = vpop.f32.mrf.mxu0
      %562 = vmatprep.mubr.f32.mxu0 0.0
      %563 = vmatmul.mubr.f32.gmra.mxu0 %v399
      %v564 = vpop.f32.mrf.mxu0
      %v565 = vadd.f32 0.0, %v564
      %v566 = vpop.f32.mrf.mxu0
      %567 = vmatprep.mubr.f32.mxu0 0.0
      %568 = vmatmul.mubr.f32.gmra.mxu0 %v402
      %v569 = vpop.f32.mrf.mxu0
      %v570 = vadd.f32 0.0, %v569
      %v571 = vpop.f32.mrf.mxu0
      %572 = vmatprep.mubr.f32.mxu0 0.0
      %573 = vmatmul.mubr.f32.gmra.mxu0 %v405
      %v574 = vpop.f32.mrf.mxu0
      %v575 = vadd.f32 0.0, %v574
      %v576 = vpop.f32.mrf.mxu0
      %577 = vmatprep.mubr.f32.mxu0 0.0
      %578 = vmatmul.mubr.f32.gmra.mxu0 %v408
      %v579 = vpop.f32.mrf.mxu0
      %v580 = vadd.f32 0.0, %v579
      %v581 = vpop.f32.mrf.mxu0
      %582 = vmatprep.mubr.f32.mxu0 0.0
      %583 = vmatmul.mubr.f32.gmra.mxu0 %v411
      %v584 = vpop.f32.mrf.mxu0
      %v585 = vadd.f32 0.0, %v584
      %v586 = vpop.f32.mrf.mxu0
      %587 = vmatprep.mubr.f32.mxu0 0.0
      %588 = vmatmul.mubr.f32.gmra.mxu0 %v414
      %v589 = vpop.f32.mrf.mxu0
      %v590 = vadd.f32 0.0, %v589
      %v591 = vpop.f32.mrf.mxu0
      %592 = vmatprep.mubr.f32.mxu0 0.0
      %593 = vmatmul.mubr.f32.gmra.mxu0 %v417
      %v594 = vpop.f32.mrf.mxu0
      %v595 = vadd.f32 0.0, %v594
      %v596 = vpop.f32.mrf.mxu0
      %597 = vmatprep.mubr.f32.mxu0 0.0
      %598 = vmatmul.mubr.f32.gmra.mxu0 %v420
      %v599 = vpop.f32.mrf.mxu0
      %v600 = vadd.f32 0.0, %v599
      %v601 = vpop.f32.mrf.mxu0
      %602 = vmatprep.mubr.f32.mxu0 0.0
      %603 = vmatmul.mubr.f32.gmra.mxu0 %v423
      %v604 = vpop.f32.mrf.mxu0
      %v605 = vadd.f32 0.0, %v604
      %v606 = vpop.f32.mrf.mxu0
      %607 = vmatprep.mubr.f32.mxu0 0.0
      %608 = vmatmul.mubr.f32.gmra.mxu0 %v426
      %v609 = vpop.f32.mrf.mxu0
      %v610 = vadd.f32 0.0, %v609
      %v611 = vpop.f32.mrf.mxu0
      %612 = vmatprep.mubr.f32.mxu0 0.0
      %613 = vmatmul.mubr.f32.gmra.mxu0 %v429
      %v614 = vpop.f32.mrf.mxu0
      %v615 = vadd.f32 0.0, %v614
      %v616 = vpop.f32.mrf.mxu0
      %617 = vmatprep.mubr.f32.mxu0 0.0
      %618 = vmatmul.mubr.f32.gmra.mxu0 %v432
      %v619 = vpop.f32.mrf.mxu0
      %v620 = vadd.f32 0.0, %v619
      %v621 = vpop.f32.mrf.mxu0
      %622 = vmatprep.mubr.f32.mxu0 0.0
      %623 = vmatmul.mubr.f32.gmra.mxu0 %v435
      %v624 = vpop.f32.mrf.mxu0
      %v625 = vadd.f32 0.0, %v624
      %v626 = vpop.f32.mrf.mxu0
      %627 = vmatprep.mubr.f32.mxu0 0.0
      %628 = vmatmul.mubr.f32.gmra.mxu0 %v438
      %v629 = vpop.f32.mrf.mxu0
      %v630 = vadd.f32 0.0, %v629
      %v631 = vpop.f32.mrf.mxu0
      %632 = vdwg.mxu0
      %v633 = vld [vmem:[#allocation2] sm:$0xff]
      %v634 = vld [vmem:[#allocation2 + $0x8] sm:$0xff]
      %v635 = vld [vmem:[#allocation2 + $0x10] sm:$0xff]
      %v636 = vld [vmem:[#allocation2 + $0x18] sm:$0xff]
      %v637 = vld [vmem:[#allocation2 + $0x20] sm:$0xff]
      %v638 = vld [vmem:[#allocation2 + $0x28] sm:$0xff]
      %v639 = vld [vmem:[#allocation2 + $0x30] sm:$0xff]
      %v640 = vld [vmem:[#allocation2 + $0x38] sm:$0xff]
      %v641 = vld [vmem:[#allocation2 + $0x40] sm:$0xff]
      %v642 = vld [vmem:[#allocation2 + $0x48] sm:$0xff]
      %v643 = vld [vmem:[#allocation2 + $0x50] sm:$0xff]
      %v644 = vld [vmem:[#allocation2 + $0x58] sm:$0xff]
      %v645 = vld [vmem:[#allocation2 + $0x60] sm:$0xff]
      %v646 = vld [vmem:[#allocation2 + $0x68] sm:$0xff]
      %v647 = vld [vmem:[#allocation2 + $0x70] sm:$0xff]
      %v648 = vld [vmem:[#allocation2 + $0x78] sm:$0xff]
      %649 = vmax.xlane.f32.xlu0 %v555
      %v650 = vpop.xlane.xlu0 %649
      %651 = vmax.xlane.f32.xlu0 %v560
      %v652 = vpop.xlane.xlu0 %651
      %653 = vmax.xlane.f32.xlu0 %v565
      %v654 = vpop.xlane.xlu0 %653
      %655 = vmax.xlane.f32.xlu0 %v570
      %v656 = vpop.xlane.xlu0 %655
      %657 = vmax.xlane.f32.xlu0 %v575
      %v658 = vpop.xlane.xlu0 %657
      %659 = vmax.xlane.f32.xlu0 %v580
      %v660 = vpop.xlane.xlu0 %659
      %661 = vmax.xlane.f32.xlu0 %v585
      %v662 = vpop.xlane.xlu0 %661
      %663 = vmax.xlane.f32.xlu0 %v590
      %v664 = vpop.xlane.xlu0 %663
      %665 = vmax.xlane.f32.xlu0 %v595
      %v666 = vpop.xlane.xlu0 %665
      %667 = vmax.xlane.f32.xlu0 %v600
      %v668 = vpop.xlane.xlu0 %667
      %669 = vmax.xlane.f32.xlu0 %v605
      %v670 = vpop.xlane.xlu0 %669
      %671 = vmax.xlane.f32.xlu0 %v610
      %v672 = vpop.xlane.xlu0 %671
      %673 = vmax.xlane.f32.xlu0 %v615
      %v674 = vpop.xlane.xlu0 %673
      %675 = vmax.xlane.f32.xlu0 %v620
      %v676 = vpop.xlane.xlu0 %675
      %677 = vmax.xlane.f32.xlu0 %v625
      %v678 = vpop.xlane.xlu0 %677
      %679 = vmax.xlane.f32.xlu0 %v630
      %v680 = vpop.xlane.xlu0 %679
      %v681 = vmax.f32 %v633, %v650
      %v682 = vmax.f32 %v634, %v652
      %v683 = vmax.f32 %v635, %v654
      %v684 = vmax.f32 %v636, %v656
      %v685 = vmax.f32 %v637, %v658
      %v686 = vmax.f32 %v638, %v660
      %v687 = vmax.f32 %v639, %v662
      %v688 = vmax.f32 %v640, %v664
      %v689 = vmax.f32 %v641, %v666
      %v690 = vmax.f32 %v642, %v668
      %v691 = vmax.f32 %v643, %v670
      %v692 = vmax.f32 %v644, %v672
      %v693 = vmax.f32 %v645, %v674
      %v694 = vmax.f32 %v646, %v676
      %v695 = vmax.f32 %v647, %v678
      %v696 = vmax.f32 %v648, %v680
      %v697 = vsub.f32 %v633, %v681
      %v698 = vsub.f32 %v634, %v682
      %v699 = vsub.f32 %v635, %v683
      %v700 = vsub.f32 %v636, %v684
      %v701 = vsub.f32 %v637, %v685
      %v702 = vsub.f32 %v638, %v686
      %v703 = vsub.f32 %v639, %v687
      %v704 = vsub.f32 %v640, %v688
      %v705 = vsub.f32 %v641, %v689
      %v706 = vsub.f32 %v642, %v690
      %v707 = vsub.f32 %v643, %v691
      %v708 = vsub.f32 %v644, %v692
      %v709 = vsub.f32 %v645, %v693
      %v710 = vsub.f32 %v646, %v694
      %v711 = vsub.f32 %v647, %v695
      %v712 = vsub.f32 %v648, %v696
      %v713 = vmul.f32 %v697, 1.442695
      %v714 = vpow.pop %v713
      %v715 = vmul.f32 %v698, 1.442695
      %v716 = vpow.pop %v715
      %v717 = vmul.f32 %v699, 1.442695
      %v718 = vpow.pop %v717
      %v719 = vmul.f32 %v700, 1.442695
      %v720 = vpow.pop %v719
      %v721 = vmul.f32 %v701, 1.442695
      %v722 = vpow.pop %v721
      %v723 = vmul.f32 %v702, 1.442695
      %v724 = vpow.pop %v723
      %v725 = vmul.f32 %v703, 1.442695
      %v726 = vpow.pop %v725
      %v727 = vmul.f32 %v704, 1.442695
      %v728 = vpow.pop %v727
      %v729 = vmul.f32 %v705, 1.442695
      %v730 = vpow.pop %v729
      %v731 = vmul.f32 %v706, 1.442695
      %v732 = vpow.pop %v731
      %v733 = vmul.f32 %v707, 1.442695
      %v734 = vpow.pop %v733
      %v735 = vmul.f32 %v708, 1.442695
      %v736 = vpow.pop %v735
      %v737 = vmul.f32 %v709, 1.442695
      %v738 = vpow.pop %v737
      %v739 = vmul.f32 %v710, 1.442695
      %v740 = vpow.pop %v739
      %v741 = vmul.f32 %v711, 1.442695
      %v742 = vpow.pop %v741
      %v743 = vmul.f32 %v712, 1.442695
      %v744 = vpow.pop %v743
      %746 = vset.pattern.permute.xlu0 0
      %747 = vperm.xlu0 %746, %v681
      %v748 = vpop.permute.xlu0 %747
      %751 = vset.pattern.permute.xlu0 0
      %752 = vperm.xlu0 %751, %v682
      %v753 = vpop.permute.xlu0 %752
      %756 = vset.pattern.permute.xlu0 0
      %757 = vperm.xlu0 %756, %v683
      %v758 = vpop.permute.xlu0 %757
      %761 = vset.pattern.permute.xlu0 0
      %762 = vperm.xlu0 %761, %v684
      %v763 = vpop.permute.xlu0 %762
      %766 = vset.pattern.permute.xlu0 0
      %767 = vperm.xlu0 %766, %v685
      %v768 = vpop.permute.xlu0 %767
      %771 = vset.pattern.permute.xlu0 0
      %772 = vperm.xlu0 %771, %v686
      %v773 = vpop.permute.xlu0 %772
      %776 = vset.pattern.permute.xlu0 0
      %777 = vperm.xlu0 %776, %v687
      %v778 = vpop.permute.xlu0 %777
      %781 = vset.pattern.permute.xlu0 0
      %782 = vperm.xlu0 %781, %v688
      %v783 = vpop.permute.xlu0 %782
      %786 = vset.pattern.permute.xlu0 0
      %787 = vperm.xlu0 %786, %v689
      %v788 = vpop.permute.xlu0 %787
      %791 = vset.pattern.permute.xlu0 0
      %792 = vperm.xlu0 %791, %v690
      %v793 = vpop.permute.xlu0 %792
      %796 = vset.pattern.permute.xlu0 0
      %797 = vperm.xlu0 %796, %v691
      %v798 = vpop.permute.xlu0 %797
      %801 = vset.pattern.permute.xlu0 0
      %802 = vperm.xlu0 %801, %v692
      %v803 = vpop.permute.xlu0 %802
      %806 = vset.pattern.permute.xlu0 0
      %807 = vperm.xlu0 %806, %v693
      %v808 = vpop.permute.xlu0 %807
      %811 = vset.pattern.permute.xlu0 0
      %812 = vperm.xlu0 %811, %v694
      %v813 = vpop.permute.xlu0 %812
      %816 = vset.pattern.permute.xlu0 0
      %817 = vperm.xlu0 %816, %v695
      %v818 = vpop.permute.xlu0 %817
      %821 = vset.pattern.permute.xlu0 0
      %822 = vperm.xlu0 %821, %v696
      %v823 = vpop.permute.xlu0 %822
      %v825 = vsub.f32 %v555, %v748
      %v826 = vsub.f32 %v560, %v753
      %v827 = vsub.f32 %v565, %v758
      %v828 = vsub.f32 %v570, %v763
      %v829 = vsub.f32 %v575, %v768
      %v830 = vsub.f32 %v580, %v773
      %v831 = vsub.f32 %v585, %v778
      %v832 = vsub.f32 %v590, %v783
      %v833 = vsub.f32 %v595, %v788
      %v834 = vsub.f32 %v600, %v793
      %v835 = vsub.f32 %v605, %v798
      %v836 = vsub.f32 %v610, %v803
      %v837 = vsub.f32 %v615, %v808
      %v838 = vsub.f32 %v620, %v813
      %v839 = vsub.f32 %v625, %v818
      %v840 = vsub.f32 %v630, %v823
      %v841 = vmul.f32 %v825, 1.442695
      %v842 = vpow.pop %v841
      %v843 = vmul.f32 %v826, 1.442695
      %v844 = vpow.pop %v843
      %v845 = vmul.f32 %v827, 1.442695
      %v846 = vpow.pop %v845
      %v847 = vmul.f32 %v828, 1.442695
      %v848 = vpow.pop %v847
      %v849 = vmul.f32 %v829, 1.442695
      %v850 = vpow.pop %v849
      %v851 = vmul.f32 %v830, 1.442695
      %v852 = vpow.pop %v851
      %v853 = vmul.f32 %v831, 1.442695
      %v854 = vpow.pop %v853
      %v855 = vmul.f32 %v832, 1.442695
      %v856 = vpow.pop %v855
      %v857 = vmul.f32 %v833, 1.442695
      %v858 = vpow.pop %v857
      %v859 = vmul.f32 %v834, 1.442695
      %v860 = vpow.pop %v859
      %v861 = vmul.f32 %v835, 1.442695
      %v862 = vpow.pop %v861
      %v863 = vmul.f32 %v836, 1.442695
      %v864 = vpow.pop %v863
      %v865 = vmul.f32 %v837, 1.442695
      %v866 = vpow.pop %v865
      %v867 = vmul.f32 %v838, 1.442695
      %v868 = vpow.pop %v867
      %v869 = vmul.f32 %v839, 1.442695
      %v870 = vpow.pop %v869
      %v871 = vmul.f32 %v840, 1.442695
      %v872 = vpow.pop %v871
      %v873 = vld [vmem:[#allocation3] sm:$0xff]
      %v874 = vld [vmem:[#allocation3 + $0x8] sm:$0xff]
      %v875 = vld [vmem:[#allocation3 + $0x10] sm:$0xff]
      %v876 = vld [vmem:[#allocation3 + $0x18] sm:$0xff]
      %v877 = vld [vmem:[#allocation3 + $0x20] sm:$0xff]
      %v878 = vld [vmem:[#allocation3 + $0x28] sm:$0xff]
      %v879 = vld [vmem:[#allocation3 + $0x30] sm:$0xff]
      %v880 = vld [vmem:[#allocation3 + $0x38] sm:$0xff]
      %v881 = vld [vmem:[#allocation3 + $0x40] sm:$0xff]
      %v882 = vld [vmem:[#allocation3 + $0x48] sm:$0xff]
      %v883 = vld [vmem:[#allocation3 + $0x50] sm:$0xff]
      %v884 = vld [vmem:[#allocation3 + $0x58] sm:$0xff]
      %v885 = vld [vmem:[#allocation3 + $0x60] sm:$0xff]
      %v886 = vld [vmem:[#allocation3 + $0x68] sm:$0xff]
      %v887 = vld [vmem:[#allocation3 + $0x70] sm:$0xff]
      %v888 = vld [vmem:[#allocation3 + $0x78] sm:$0xff]
      %v889 = vmul.f32 %v714, %v873
      %v890 = vmul.f32 %v716, %v874
      %v891 = vmul.f32 %v718, %v875
      %v892 = vmul.f32 %v720, %v876
      %v893 = vmul.f32 %v722, %v877
      %v894 = vmul.f32 %v724, %v878
      %v895 = vmul.f32 %v726, %v879
      %v896 = vmul.f32 %v728, %v880
      %v897 = vmul.f32 %v730, %v881
      %v898 = vmul.f32 %v732, %v882
      %v899 = vmul.f32 %v734, %v883
      %v900 = vmul.f32 %v736, %v884
      %v901 = vmul.f32 %v738, %v885
      %v902 = vmul.f32 %v740, %v886
      %v903 = vmul.f32 %v742, %v887
      %v904 = vmul.f32 %v744, %v888
      %905 = vadd.xlane.f32.xlu0 %v842
      %v906 = vpop.xlane.xlu0 %905
      %907 = vadd.xlane.f32.xlu0 %v844
      %v908 = vpop.xlane.xlu0 %907
      %909 = vadd.xlane.f32.xlu0 %v846
      %v910 = vpop.xlane.xlu0 %909
      %911 = vadd.xlane.f32.xlu0 %v848
      %v912 = vpop.xlane.xlu0 %911
      %913 = vadd.xlane.f32.xlu0 %v850
      %v914 = vpop.xlane.xlu0 %913
      %915 = vadd.xlane.f32.xlu0 %v852
      %v916 = vpop.xlane.xlu0 %915
      %917 = vadd.xlane.f32.xlu0 %v854
      %v918 = vpop.xlane.xlu0 %917
      %919 = vadd.xlane.f32.xlu0 %v856
      %v920 = vpop.xlane.xlu0 %919
      %921 = vadd.xlane.f32.xlu0 %v858
      %v922 = vpop.xlane.xlu0 %921
      %923 = vadd.xlane.f32.xlu0 %v860
      %v924 = vpop.xlane.xlu0 %923
      %925 = vadd.xlane.f32.xlu0 %v862
      %v926 = vpop.xlane.xlu0 %925
      %927 = vadd.xlane.f32.xlu0 %v864
      %v928 = vpop.xlane.xlu0 %927
      %929 = vadd.xlane.f32.xlu0 %v866
      %v930 = vpop.xlane.xlu0 %929
      %931 = vadd.xlane.f32.xlu0 %v868
      %v932 = vpop.xlane.xlu0 %931
      %933 = vadd.xlane.f32.xlu0 %v870
      %v934 = vpop.xlane.xlu0 %933
      %935 = vadd.xlane.f32.xlu0 %v872
      %v936 = vpop.xlane.xlu0 %935
      %v937 = vadd.f32 %v889, %v906
      %v938 = vadd.f32 %v890, %v908
      %v939 = vadd.f32 %v891, %v910
      %v940 = vadd.f32 %v892, %v912
      %v941 = vadd.f32 %v893, %v914
      %v942 = vadd.f32 %v894, %v916
      %v943 = vadd.f32 %v895, %v918
      %v944 = vadd.f32 %v896, %v920
      %v945 = vadd.f32 %v897, %v922
      %v946 = vadd.f32 %v898, %v924
      %v947 = vadd.f32 %v899, %v926
      %v948 = vadd.f32 %v900, %v928
      %v949 = vadd.f32 %v901, %v930
      %v950 = vadd.f32 %v902, %v932
      %v951 = vadd.f32 %v903, %v934
      %v952 = vadd.f32 %v904, %v936
      %vm953 = vcmask 7168
      %954 = vst.msk [vmem:[#allocation3] sm:$0xff] %vm953, %v937
      %955 = vst.msk [vmem:[#allocation3 + $0x8] sm:$0xff] %vm953, %v938
      %956 = vst.msk [vmem:[#allocation3 + $0x10] sm:$0xff] %vm953, %v939
      %957 = vst.msk [vmem:[#allocation3 + $0x18] sm:$0xff] %vm953, %v940
      %958 = vst.msk [vmem:[#allocation3 + $0x20] sm:$0xff] %vm953, %v941
      %959 = vst.msk [vmem:[#allocation3 + $0x28] sm:$0xff] %vm953, %v942
      %960 = vst.msk [vmem:[#allocation3 + $0x30] sm:$0xff] %vm953, %v943
      %961 = vst.msk [vmem:[#allocation3 + $0x38] sm:$0xff] %vm953, %v944
      %962 = vst.msk [vmem:[#allocation3 + $0x40] sm:$0xff] %vm953, %v945
      %963 = vst.msk [vmem:[#allocation3 + $0x48] sm:$0xff] %vm953, %v946
      %964 = vst.msk [vmem:[#allocation3 + $0x50] sm:$0xff] %vm953, %v947
      %965 = vst.msk [vmem:[#allocation3 + $0x58] sm:$0xff] %vm953, %v948
      %966 = vst.msk [vmem:[#allocation3 + $0x60] sm:$0xff] %vm953, %v949
      %967 = vst.msk [vmem:[#allocation3 + $0x68] sm:$0xff] %vm953, %v950
      %968 = vst.msk [vmem:[#allocation3 + $0x70] sm:$0xff] %vm953, %v951
      %969 = vst.msk [vmem:[#allocation3 + $0x78] sm:$0xff] %vm953, %v952
      %v970 = vld [vmem:[#allocation4] sm:$0xff]
      %v971 = vld [vmem:[#allocation4 + $0x8] sm:$0xff]
      %v972 = vld [vmem:[#allocation4 + $0x10] sm:$0xff]
      %v973 = vld [vmem:[#allocation4 + $0x18] sm:$0xff]
      %v974 = vld [vmem:[#allocation4 + $0x20] sm:$0xff]
      %v975 = vld [vmem:[#allocation4 + $0x28] sm:$0xff]
      %v976 = vld [vmem:[#allocation4 + $0x30] sm:$0xff]
      %v977 = vld [vmem:[#allocation4 + $0x38] sm:$0xff]
      %v978 = vld [vmem:[#allocation4 + $0x40] sm:$0xff]
      %v979 = vld [vmem:[#allocation4 + $0x48] sm:$0xff]
      %v980 = vld [vmem:[#allocation4 + $0x50] sm:$0xff]
      %v981 = vld [vmem:[#allocation4 + $0x58] sm:$0xff]
      %v982 = vld [vmem:[#allocation4 + $0x60] sm:$0xff]
      %v983 = vld [vmem:[#allocation4 + $0x68] sm:$0xff]
      %v984 = vld [vmem:[#allocation4 + $0x70] sm:$0xff]
      %v985 = vld [vmem:[#allocation4 + $0x78] sm:$0xff]
      %987 = vset.pattern.permute.xlu0 0
      %988 = vperm.xlu0 %987, %v714
      %v989 = vpop.permute.xlu0 %988
      %992 = vset.pattern.permute.xlu0 0
      %993 = vperm.xlu0 %992, %v716
      %v994 = vpop.permute.xlu0 %993
      %997 = vset.pattern.permute.xlu0 0
      %998 = vperm.xlu0 %997, %v718
      %v999 = vpop.permute.xlu0 %998
      %1002 = vset.pattern.permute.xlu0 0
      %1003 = vperm.xlu0 %1002, %v720
      %v1004 = vpop.permute.xlu0 %1003
      %1007 = vset.pattern.permute.xlu0 0
      %1008 = vperm.xlu0 %1007, %v722
      %v1009 = vpop.permute.xlu0 %1008
      %1012 = vset.pattern.permute.xlu0 0
      %1013 = vperm.xlu0 %1012, %v724
      %v1014 = vpop.permute.xlu0 %1013
      %1017 = vset.pattern.permute.xlu0 0
      %1018 = vperm.xlu0 %1017, %v726
      %v1019 = vpop.permute.xlu0 %1018
      %1022 = vset.pattern.permute.xlu0 0
      %1023 = vperm.xlu0 %1022, %v728
      %v1024 = vpop.permute.xlu0 %1023
      %1027 = vset.pattern.permute.xlu0 0
      %1028 = vperm.xlu0 %1027, %v730
      %v1029 = vpop.permute.xlu0 %1028
      %1032 = vset.pattern.permute.xlu0 0
      %1033 = vperm.xlu0 %1032, %v732
      %v1034 = vpop.permute.xlu0 %1033
      %1037 = vset.pattern.permute.xlu0 0
      %1038 = vperm.xlu0 %1037, %v734
      %v1039 = vpop.permute.xlu0 %1038
      %1042 = vset.pattern.permute.xlu0 0
      %1043 = vperm.xlu0 %1042, %v736
      %v1044 = vpop.permute.xlu0 %1043
      %1047 = vset.pattern.permute.xlu0 0
      %1048 = vperm.xlu0 %1047, %v738
      %v1049 = vpop.permute.xlu0 %1048
      %1052 = vset.pattern.permute.xlu0 0
      %1053 = vperm.xlu0 %1052, %v740
      %v1054 = vpop.permute.xlu0 %1053
      %1057 = vset.pattern.permute.xlu0 0
      %1058 = vperm.xlu0 %1057, %v742
      %v1059 = vpop.permute.xlu0 %1058
      %1062 = vset.pattern.permute.xlu0 0
      %1063 = vperm.xlu0 %1062, %v744
      %v1064 = vpop.permute.xlu0 %1063
      %v1066 = vmul.f32 %v989, %v970
      %v1067 = vmul.f32 %v994, %v971
      %v1068 = vmul.f32 %v999, %v972
      %v1069 = vmul.f32 %v1004, %v973
      %v1070 = vmul.f32 %v1009, %v974
      %v1071 = vmul.f32 %v1014, %v975
      %v1072 = vmul.f32 %v1019, %v976
      %v1073 = vmul.f32 %v1024, %v977
      %v1074 = vmul.f32 %v1029, %v978
      %v1075 = vmul.f32 %v1034, %v979
      %v1076 = vmul.f32 %v1039, %v980
      %v1077 = vmul.f32 %v1044, %v981
      %v1078 = vmul.f32 %v1049, %v982
      %v1079 = vmul.f32 %v1054, %v983
      %v1080 = vmul.f32 %v1059, %v984
      %v1081 = vmul.f32 %v1064, %v985
      %1082 = vmatprep.subr.mxu0 0.0
      %1083 = vmatpush1.msra.mxu0 %v390
      %1084 = vmatprep.subr.mxu0 0.0
      %1085 = vmatpush1.msra.mxu0 %v389
      %1086 = vmatprep.subr.mxu0 0.0
      %1087 = vmatpush1.msra.mxu0 %v388
      %1088 = vmatprep.subr.mxu0 0.0
      %1089 = vmatpush1.msra.mxu0 %v387
      %1090 = vmatprep.subr.mxu0 0.0
      %1091 = vmatpush1.msra.mxu0 %v386
      %1092 = vmatprep.subr.mxu0 0.0
      %1093 = vmatpush1.msra.mxu0 %v385
      %1094 = vmatprep.subr.mxu0 0.0
      %1095 = vmatpush1.msra.mxu0 %v384
      %1096 = vmatprep.subr.mxu0 0.0
      %1097 = vmatpush1.msra.mxu0 %v383
      %1098 = vmatprep.subr.mxu0 0.0
      %1099 = vmatpush1.msra.mxu0 %v382
      %1100 = vmatprep.subr.mxu0 0.0
      %1101 = vmatpush1.msra.mxu0 %v381
      %1102 = vmatprep.subr.mxu0 0.0
      %1103 = vmatpush1.msra.mxu0 %v380
      %1104 = vmatprep.subr.mxu0 0.0
      %1105 = vmatpush1.msra.mxu0 %v379
      %1106 = vmatprep.subr.mxu0 0.0
      %1107 = vmatpush1.msra.mxu0 %v378
      %1108 = vmatprep.subr.mxu0 0.0
      %1109 = vmatpush1.msra.mxu0 %v377
      %1110 = vmatprep.subr.mxu0 0.0
      %1111 = vmatpush1.msra.mxu0 %v376
      %1112 = vmatprep.subr.mxu0 0.0
      %1113 = vmatpush1.msra.mxu0 %v375
      %1114 = vmatprep.subr.mxu0 0.0
      %1115 = vmatpush2.msra.mxu0 0.0
      %1116 = vmatprep.subr.mxu0 0.0
      %1117 = vmatpush2.msra.mxu0 0.0
      %1118 = vmatprep.subr.mxu0 0.0
      %1119 = vmatpush2.msra.mxu0 0.0
      %1120 = vmatprep.subr.mxu0 0.0
      %1121 = vmatpush2.msra.mxu0 0.0
      %1122 = vmatprep.subr.mxu0 0.0
      %1123 = vmatpush2.msra.mxu0 0.0
      %1124 = vmatprep.subr.mxu0 0.0
      %1125 = vmatpush2.msra.mxu0 0.0
      %1126 = vmatprep.subr.mxu0 0.0
      %1127 = vmatpush2.msra.mxu0 0.0
      %1128 = vmatprep.subr.mxu0 0.0
      %1129 = vmatpush2.msra.mxu0 0.0
      %1130 = vmatprep.subr.mxu0 0.0
      %1131 = vmatpush2.msra.mxu0 0.0
      %1132 = vmatprep.subr.mxu0 0.0
      %1133 = vmatpush2.msra.mxu0 0.0
      %1134 = vmatprep.subr.mxu0 0.0
      %1135 = vmatpush2.msra.mxu0 0.0
      %1136 = vmatprep.subr.mxu0 0.0
      %1137 = vmatpush2.msra.mxu0 0.0
      %1138 = vmatprep.subr.mxu0 0.0
      %1139 = vmatpush2.msra.mxu0 0.0
      %1140 = vmatprep.subr.mxu0 0.0
      %1141 = vmatpush2.msra.mxu0 0.0
      %1142 = vmatprep.subr.mxu0 0.0
      %1143 = vmatpush2.msra.mxu0 0.0
      %1144 = vmatprep.subr.mxu0 0.0
      %1145 = vmatpush2.msra.mxu0 0.0
      %1146 = vmatprep.mubr.f32.mxu0 0.0
      %1147 = vmatmul.mubr.f32.gmra.mxu0 %v842
      %v1148 = vpop.f32.mrf.mxu0
      %v1149 = vadd.f32 0.0, %v1148
      %v1150 = vpop.f32.mrf.mxu0
      %1151 = vmatprep.mubr.f32.mxu0 0.0
      %1152 = vmatmul.mubr.f32.gmra.mxu0 %v844
      %v1153 = vpop.f32.mrf.mxu0
      %v1154 = vadd.f32 0.0, %v1153
      %v1155 = vpop.f32.mrf.mxu0
      %1156 = vmatprep.mubr.f32.mxu0 0.0
      %1157 = vmatmul.mubr.f32.gmra.mxu0 %v846
      %v1158 = vpop.f32.mrf.mxu0
      %v1159 = vadd.f32 0.0, %v1158
      %v1160 = vpop.f32.mrf.mxu0
      %1161 = vmatprep.mubr.f32.mxu0 0.0
      %1162 = vmatmul.mubr.f32.gmra.mxu0 %v848
      %v1163 = vpop.f32.mrf.mxu0
      %v1164 = vadd.f32 0.0, %v1163
      %v1165 = vpop.f32.mrf.mxu0
      %1166 = vmatprep.mubr.f32.mxu0 0.0
      %1167 = vmatmul.mubr.f32.gmra.mxu0 %v850
      %v1168 = vpop.f32.mrf.mxu0
      %v1169 = vadd.f32 0.0, %v1168
      %v1170 = vpop.f32.mrf.mxu0
      %1171 = vmatprep.mubr.f32.mxu0 0.0
      %1172 = vmatmul.mubr.f32.gmra.mxu0 %v852
      %v1173 = vpop.f32.mrf.mxu0
      %v1174 = vadd.f32 0.0, %v1173
      %v1175 = vpop.f32.mrf.mxu0
      %1176 = vmatprep.mubr.f32.mxu0 0.0
      %1177 = vmatmul.mubr.f32.gmra.mxu0 %v854
      %v1178 = vpop.f32.mrf.mxu0
      %v1179 = vadd.f32 0.0, %v1178
      %v1180 = vpop.f32.mrf.mxu0
      %1181 = vmatprep.mubr.f32.mxu0 0.0
      %1182 = vmatmul.mubr.f32.gmra.mxu0 %v856
      %v1183 = vpop.f32.mrf.mxu0
      %v1184 = vadd.f32 0.0, %v1183
      %v1185 = vpop.f32.mrf.mxu0
      %1186 = vmatprep.mubr.f32.mxu0 0.0
      %1187 = vmatmul.mubr.f32.gmra.mxu0 %v858
      %v1188 = vpop.f32.mrf.mxu0
      %v1189 = vadd.f32 0.0, %v1188
      %v1190 = vpop.f32.mrf.mxu0
      %1191 = vmatprep.mubr.f32.mxu0 0.0
      %1192 = vmatmul.mubr.f32.gmra.mxu0 %v860
      %v1193 = vpop.f32.mrf.mxu0
      %v1194 = vadd.f32 0.0, %v1193
      %v1195 = vpop.f32.mrf.mxu0
      %1196 = vmatprep.mubr.f32.mxu0 0.0
      %1197 = vmatmul.mubr.f32.gmra.mxu0 %v862
      %v1198 = vpop.f32.mrf.mxu0
      %v1199 = vadd.f32 0.0, %v1198
      %v1200 = vpop.f32.mrf.mxu0
      %1201 = vmatprep.mubr.f32.mxu0 0.0
      %1202 = vmatmul.mubr.f32.gmra.mxu0 %v864
      %v1203 = vpop.f32.mrf.mxu0
      %v1204 = vadd.f32 0.0, %v1203
      %v1205 = vpop.f32.mrf.mxu0
      %1206 = vmatprep.mubr.f32.mxu0 0.0
      %1207 = vmatmul.mubr.f32.gmra.mxu0 %v866
      %v1208 = vpop.f32.mrf.mxu0
      %v1209 = vadd.f32 0.0, %v1208
      %v1210 = vpop.f32.mrf.mxu0
      %1211 = vmatprep.mubr.f32.mxu0 0.0
      %1212 = vmatmul.mubr.f32.gmra.mxu0 %v868
      %v1213 = vpop.f32.mrf.mxu0
      %v1214 = vadd.f32 0.0, %v1213
      %v1215 = vpop.f32.mrf.mxu0
      %1216 = vmatprep.mubr.f32.mxu0 0.0
      %1217 = vmatmul.mubr.f32.gmra.mxu0 %v870
      %v1218 = vpop.f32.mrf.mxu0
      %v1219 = vadd.f32 0.0, %v1218
      %v1220 = vpop.f32.mrf.mxu0
      %1221 = vmatprep.mubr.f32.mxu0 0.0
      %1222 = vmatmul.mubr.f32.gmra.mxu0 %v872
      %v1223 = vpop.f32.mrf.mxu0
      %v1224 = vadd.f32 0.0, %v1223
      %v1225 = vpop.f32.mrf.mxu0
      %1226 = vdwg.mxu0
      %v1227 = vadd.f32 %v1066, %v1149
      %v1228 = vadd.f32 %v1067, %v1154
      %v1229 = vadd.f32 %v1068, %v1159
      %v1230 = vadd.f32 %v1069, %v1164
      %v1231 = vadd.f32 %v1070, %v1169
      %v1232 = vadd.f32 %v1071, %v1174
      %v1233 = vadd.f32 %v1072, %v1179
      %v1234 = vadd.f32 %v1073, %v1184
      %v1235 = vadd.f32 %v1074, %v1189
      %v1236 = vadd.f32 %v1075, %v1194
      %v1237 = vadd.f32 %v1076, %v1199
      %v1238 = vadd.f32 %v1077, %v1204
      %v1239 = vadd.f32 %v1078, %v1209
      %v1240 = vadd.f32 %v1079, %v1214
      %v1241 = vadd.f32 %v1080, %v1219
      %v1242 = vadd.f32 %v1081, %v1224
      %1243 = vst.msk [vmem:[#allocation4] sm:$0xff] %vm391, %v1227
      %1244 = vst.msk [vmem:[#allocation4 + $0x8] sm:$0xff] %vm391, %v1228
      %1245 = vst.msk [vmem:[#allocation4 + $0x10] sm:$0xff] %vm391, %v1229
      %1246 = vst.msk [vmem:[#allocation4 + $0x18] sm:$0xff] %vm391, %v1230
      %1247 = vst.msk [vmem:[#allocation4 + $0x20] sm:$0xff] %vm391, %v1231
      %1248 = vst.msk [vmem:[#allocation4 + $0x28] sm:$0xff] %vm391, %v1232
      %1249 = vst.msk [vmem:[#allocation4 + $0x30] sm:$0xff] %vm391, %v1233
      %1250 = vst.msk [vmem:[#allocation4 + $0x38] sm:$0xff] %vm391, %v1234
      %1251 = vst.msk [vmem:[#allocation4 + $0x40] sm:$0xff] %vm391, %v1235
      %1252 = vst.msk [vmem:[#allocation4 + $0x48] sm:$0xff] %vm391, %v1236
      %1253 = vst.msk [vmem:[#allocation4 + $0x50] sm:$0xff] %vm391, %v1237
      %1254 = vst.msk [vmem:[#allocation4 + $0x58] sm:$0xff] %vm391, %v1238
      %1255 = vst.msk [vmem:[#allocation4 + $0x60] sm:$0xff] %vm391, %v1239
      %1256 = vst.msk [vmem:[#allocation4 + $0x68] sm:$0xff] %vm391, %v1240
      %1257 = vst.msk [vmem:[#allocation4 + $0x70] sm:$0xff] %vm391, %v1241
      %1258 = vst.msk [vmem:[#allocation4 + $0x78] sm:$0xff] %vm391, %v1242
      %1259 = vst.msk [vmem:[#allocation2] sm:$0xff] %vm953, %v681
      %1260 = vst.msk [vmem:[#allocation2 + $0x8] sm:$0xff] %vm953, %v682
      %1261 = vst.msk [vmem:[#allocation2 + $0x10] sm:$0xff] %vm953, %v683
      %1262 = vst.msk [vmem:[#allocation2 + $0x18] sm:$0xff] %vm953, %v684
      %1263 = vst.msk [vmem:[#allocation2 + $0x20] sm:$0xff] %vm953, %v685
      %1264 = vst.msk [vmem:[#allocation2 + $0x28] sm:$0xff] %vm953, %v686
      %1265 = vst.msk [vmem:[#allocation2 + $0x30] sm:$0xff] %vm953, %v687
      %1266 = vst.msk [vmem:[#allocation2 + $0x38] sm:$0xff] %vm953, %v688
      %1267 = vst.msk [vmem:[#allocation2 + $0x40] sm:$0xff] %vm953, %v689
      %1268 = vst.msk [vmem:[#allocation2 + $0x48] sm:$0xff] %vm953, %v690
      %1269 = vst.msk [vmem:[#allocation2 + $0x50] sm:$0xff] %vm953, %v691
      %1270 = vst.msk [vmem:[#allocation2 + $0x58] sm:$0xff] %vm953, %v692
      %1271 = vst.msk [vmem:[#allocation2 + $0x60] sm:$0xff] %vm953, %v693
      %1272 = vst.msk [vmem:[#allocation2 + $0x68] sm:$0xff] %vm953, %v694
      %1273 = vst.msk [vmem:[#allocation2 + $0x70] sm:$0xff] %vm953, %v695
      %1274 = vst.msk [vmem:[#allocation2 + $0x78] sm:$0xff] %vm953, %v696
      %p1275 = scmp.eq.s32.totalorder %s21, 1
      // Predicated region
      $region37: #{tpu_custom_call.1} parent=31 // pred_check
        %p1276 = pneg %p1275
      $region38: #{tpu_custom_call.1} parent=31 // pred_check_branch
        %1278 = sbr.rel (%p1276) target = $region40
      $region39: #{tpu_custom_call.1} parent=31 // pred_region
        %v1279 = vld [vmem:[#allocation4] sm:$0xff]
        %v1280 = vld [vmem:[#allocation4 + $0x8] sm:$0xff]
        %v1281 = vld [vmem:[#allocation4 + $0x10] sm:$0xff]
        %v1282 = vld [vmem:[#allocation4 + $0x18] sm:$0xff]
        %v1283 = vld [vmem:[#allocation4 + $0x20] sm:$0xff]
        %v1284 = vld [vmem:[#allocation4 + $0x28] sm:$0xff]
        %v1285 = vld [vmem:[#allocation4 + $0x30] sm:$0xff]
        %v1286 = vld [vmem:[#allocation4 + $0x38] sm:$0xff]
        %v1287 = vld [vmem:[#allocation4 + $0x40] sm:$0xff]
        %v1288 = vld [vmem:[#allocation4 + $0x48] sm:$0xff]
        %v1289 = vld [vmem:[#allocation4 + $0x50] sm:$0xff]
        %v1290 = vld [vmem:[#allocation4 + $0x58] sm:$0xff]
        %v1291 = vld [vmem:[#allocation4 + $0x60] sm:$0xff]
        %v1292 = vld [vmem:[#allocation4 + $0x68] sm:$0xff]
        %v1293 = vld [vmem:[#allocation4 + $0x70] sm:$0xff]
        %v1294 = vld [vmem:[#allocation4 + $0x78] sm:$0xff]
        %v1295 = vld [vmem:[#allocation3] sm:$0xff]
        %v1296 = vld [vmem:[#allocation3 + $0x8] sm:$0xff]
        %v1297 = vld [vmem:[#allocation3 + $0x10] sm:$0xff]
        %v1298 = vld [vmem:[#allocation3 + $0x18] sm:$0xff]
        %v1299 = vld [vmem:[#allocation3 + $0x20] sm:$0xff]
        %v1300 = vld [vmem:[#allocation3 + $0x28] sm:$0xff]
        %v1301 = vld [vmem:[#allocation3 + $0x30] sm:$0xff]
        %v1302 = vld [vmem:[#allocation3 + $0x38] sm:$0xff]
        %v1303 = vld [vmem:[#allocation3 + $0x40] sm:$0xff]
        %v1304 = vld [vmem:[#allocation3 + $0x48] sm:$0xff]
        %v1305 = vld [vmem:[#allocation3 + $0x50] sm:$0xff]
        %v1306 = vld [vmem:[#allocation3 + $0x58] sm:$0xff]
        %v1307 = vld [vmem:[#allocation3 + $0x60] sm:$0xff]
        %v1308 = vld [vmem:[#allocation3 + $0x68] sm:$0xff]
        %v1309 = vld [vmem:[#allocation3 + $0x70] sm:$0xff]
        %v1310 = vld [vmem:[#allocation3 + $0x78] sm:$0xff]
        %1312 = vset.pattern.permute.xlu0 0
        %1313 = vperm.xlu0 %1312, %v1295
        %v1314 = vpop.permute.xlu0 %1313
        %1317 = vset.pattern.permute.xlu0 0
        %1318 = vperm.xlu0 %1317, %v1296
        %v1319 = vpop.permute.xlu0 %1318
        %1322 = vset.pattern.permute.xlu0 0
        %1323 = vperm.xlu0 %1322, %v1297
        %v1324 = vpop.permute.xlu0 %1323
        %1327 = vset.pattern.permute.xlu0 0
        %1328 = vperm.xlu0 %1327, %v1298
        %v1329 = vpop.permute.xlu0 %1328
        %1332 = vset.pattern.permute.xlu0 0
        %1333 = vperm.xlu0 %1332, %v1299
        %v1334 = vpop.permute.xlu0 %1333
        %1337 = vset.pattern.permute.xlu0 0
        %1338 = vperm.xlu0 %1337, %v1300
        %v1339 = vpop.permute.xlu0 %1338
        %1342 = vset.pattern.permute.xlu0 0
        %1343 = vperm.xlu0 %1342, %v1301
        %v1344 = vpop.permute.xlu0 %1343
        %1347 = vset.pattern.permute.xlu0 0
        %1348 = vperm.xlu0 %1347, %v1302
        %v1349 = vpop.permute.xlu0 %1348
        %1352 = vset.pattern.permute.xlu0 0
        %1353 = vperm.xlu0 %1352, %v1303
        %v1354 = vpop.permute.xlu0 %1353
        %1357 = vset.pattern.permute.xlu0 0
        %1358 = vperm.xlu0 %1357, %v1304
        %v1359 = vpop.permute.xlu0 %1358
        %1362 = vset.pattern.permute.xlu0 0
        %1363 = vperm.xlu0 %1362, %v1305
        %v1364 = vpop.permute.xlu0 %1363
        %1367 = vset.pattern.permute.xlu0 0
        %1368 = vperm.xlu0 %1367, %v1306
        %v1369 = vpop.permute.xlu0 %1368
        %1372 = vset.pattern.permute.xlu0 0
        %1373 = vperm.xlu0 %1372, %v1307
        %v1374 = vpop.permute.xlu0 %1373
        %1377 = vset.pattern.permute.xlu0 0
        %1378 = vperm.xlu0 %1377, %v1308
        %v1379 = vpop.permute.xlu0 %1378
        %1382 = vset.pattern.permute.xlu0 0
        %1383 = vperm.xlu0 %1382, %v1309
        %v1384 = vpop.permute.xlu0 %1383
        %1387 = vset.pattern.permute.xlu0 0
        %1388 = vperm.xlu0 %1387, %v1310
        %v1389 = vpop.permute.xlu0 %1388
        %v1391 = vrcp.pop %v1314
        %v1392 = vmul.f32 %v1279, %v1391
        %v1393 = vrcp.pop %v1319
        %v1394 = vmul.f32 %v1280, %v1393
        %v1395 = vrcp.pop %v1324
        %v1396 = vmul.f32 %v1281, %v1395
        %v1397 = vrcp.pop %v1329
        %v1398 = vmul.f32 %v1282, %v1397
        %v1399 = vrcp.pop %v1334
        %v1400 = vmul.f32 %v1283, %v1399
        %v1401 = vrcp.pop %v1339
        %v1402 = vmul.f32 %v1284, %v1401
        %v1403 = vrcp.pop %v1344
        %v1404 = vmul.f32 %v1285, %v1403
        %v1405 = vrcp.pop %v1349
        %v1406 = vmul.f32 %v1286, %v1405
        %v1407 = vrcp.pop %v1354
        %v1408 = vmul.f32 %v1287, %v1407
        %v1409 = vrcp.pop %v1359
        %v1410 = vmul.f32 %v1288, %v1409
        %v1411 = vrcp.pop %v1364
        %v1412 = vmul.f32 %v1289, %v1411
        %v1413 = vrcp.pop %v1369
        %v1414 = vmul.f32 %v1290, %v1413
        %v1415 = vrcp.pop %v1374
        %v1416 = vmul.f32 %v1291, %v1415
        %v1417 = vrcp.pop %v1379
        %v1418 = vmul.f32 %v1292, %v1417
        %v1419 = vrcp.pop %v1384
        %v1420 = vmul.f32 %v1293, %v1419
        %v1421 = vrcp.pop %v1389
        %v1422 = vmul.f32 %v1294, %v1421
        %1423 = vst.msk [vmem:[%s287] sm:$0xff] %vm391, %v1392
        %1424 = vst.msk [vmem:[%s287 + $0x8] sm:$0xff] %vm391, %v1394
        %1425 = vst.msk [vmem:[%s287 + $0x10] sm:$0xff] %vm391, %v1396
        %1426 = vst.msk [vmem:[%s287 + $0x18] sm:$0xff] %vm391, %v1398
        %1427 = vst.msk [vmem:[%s287 + $0x20] sm:$0xff] %vm391, %v1400
        %1428 = vst.msk [vmem:[%s287 + $0x28] sm:$0xff] %vm391, %v1402
        %1429 = vst.msk [vmem:[%s287 + $0x30] sm:$0xff] %vm391, %v1404
        %1430 = vst.msk [vmem:[%s287 + $0x38] sm:$0xff] %vm391, %v1406
        %1431 = vst.msk [vmem:[%s287 + $0x40] sm:$0xff] %vm391, %v1408
        %1432 = vst.msk [vmem:[%s287 + $0x48] sm:$0xff] %vm391, %v1410
        %1433 = vst.msk [vmem:[%s287 + $0x50] sm:$0xff] %vm391, %v1412
        %1434 = vst.msk [vmem:[%s287 + $0x58] sm:$0xff] %vm391, %v1414
        %1435 = vst.msk [vmem:[%s287 + $0x60] sm:$0xff] %vm391, %v1416
        %1436 = vst.msk [vmem:[%s287 + $0x68] sm:$0xff] %vm391, %v1418
        %1437 = vst.msk [vmem:[%s287 + $0x70] sm:$0xff] %vm391, %v1420
        %1438 = vst.msk [vmem:[%s287 + $0x78] sm:$0xff] %vm391, %v1422
      $region40: #{tpu_custom_call.1} parent=31 // pred_fallthru
        _
      %s1439 = smul.u32 16, %s20
      %p1440 = scmp.lt.s32.totalorder %s19, 7
      %s1441 = scalar_select %p1440, %s19, 7
      %p1442 = scmp.lt.s32.totalorder %s1439, 15
      %s1443 = scalar_select %p1442, %s1439, 15
      %s1444 = smul.addr %s1441, 16
      %s1445 = sadd.s32 %s1443, %s1444
      %s1446 = smul.addr %s1445, 8
      %s1447 = scalar_lea.vmem %s3, %s1446
      // Predicated region
      $region41: #{tpu_custom_call.1} parent=31 // pred_check
        %p1448 = pneg %p137
      $region42: #{tpu_custom_call.1} parent=31 // pred_check_branch
        %1450 = sbr.rel (%p1448) target = $region44
      $region43: #{tpu_custom_call.1} parent=31 // pred_region
        %s1451 = smul.u32 16, %s20
      $region44: #{tpu_custom_call.1} parent=31 // pred_fallthru
        _
    $region32: #{tpu_custom_call.1} parent=5 // pred_fallthru
      _
    %p1452 = scmp.le.s32.totalorder 2, %s9
    // Predicated region
    $region45: #{tpu_custom_call.1} parent=5 // pred_check
      %p1453 = pneg %p1452
    $region46: #{tpu_custom_call.1} parent=5 // pred_check_branch
      %1455 = sbr.rel (%p1453) target = $region48
    $region47: #{tpu_custom_call.1} parent=5 // pred_region
      %s1456 = ssub.s32 %s9, 2
      // Predicated region
      $region49: #{tpu_custom_call.1} parent=47 // pred_check
        %p1457 = pneg %p143
      $region50: #{tpu_custom_call.1} parent=47 // pred_check_branch
        %1459 = sbr.rel (%p1457) target = $region52
      $region51: #{tpu_custom_call.1} parent=47 // pred_region
        %s1460 = smul.u32 16, %s23
        %p1461 = scmp.lt.s32.totalorder %s22, 7
        %s1462 = scalar_select %p1461, %s22, 7
        %p1463 = scmp.lt.s32.totalorder %s1460, 15
        %s1464 = scalar_select %p1463, %s1460, 15
        %s1465 = smul.addr %s1462, 16
        %s1466 = sadd.s32 %s1464, %s1465
        %s1467 = smul.addr %s1466, 8
        %s1468 = scalar_lea.vmem %s3, %s1467
      $region52: #{tpu_custom_call.1} parent=47 // pred_fallthru
        _
    $region48: #{tpu_custom_call.1} parent=5 // pred_fallthru
      _
  $region6: #{tpu_custom_call.1} parent=0 // loop_footer
    %s13 = sadd.s32 1, %s9
  $region7: #{tpu_custom_call.1} parent=0 // loop_footer_branch
    %8 = sbr.rel target = $region3
  $region8: #{tpu_custom_call.1} parent=0 // loop_exit
    _

</llo_original>
